<compile_context>
chip_gen: v6e
topology: v6e:2x2x1
jax: 0.10.0
libtpu: 0.0.40
codegen_flags: <defaults>
</compile_context>

<pallas_src>
import math
import functools

import numpy as np
import jax
import jax.numpy as jnp
from jax.experimental import pallas as pl
from jax.experimental.pallas import tpu as pltpu


# ----------------------------------------------------------------------------------
# Pallas kernel: one (batch, q_tile, head) triple per grid step.
# ----------------------------------------------------------------------------------
def rga_kernel(cache_kv, collect_attn,
               xq_ref, xkt_ref, xv_ref,
               wq_ref, bq_ref, wk_ref, bk_ref, wvt_ref, bv_ref,
               wfc_ref, bfc_ref, et_ref, mask_ref,
               *outs_and_scratch):
    if collect_attn:
        out_ref, attn_ref = outs_and_scratch[0], outs_and_scratch[1]
        kt_scr, v_scr = outs_and_scratch[2], outs_and_scratch[3]
    else:
        out_ref, attn_ref = outs_and_scratch[0], None
        kt_scr, v_scr = outs_and_scratch[1], outs_and_scratch[2]

    f32, bf16 = jnp.float32, jnp.bfloat16
    qi = pl.program_id(1)
    hh = pl.program_id(2)

    TQ, d = xq_ref.shape[1], xq_ref.shape[2]
    L = xv_ref.shape[1]
    M = L                        # self-attention: len_k == len_q == M
    P = et_ref.shape[2]          # lane-padded relative axis (multiple of 128, >= M)
    dh = wq_ref.shape[2]

    # ---- K^T / V projections: full-width MXU matmuls, cached in VMEM scratch.
    # cache_kv=True : computed once per batch element (q-tile axis is sequential).
    # cache_kv=False: recomputed per q-tile (q-tile axis may be sharded across cores).
    if cache_kv:
        kv_guard = jnp.logical_and(hh == 0, qi == 0)
    else:
        kv_guard = hh == 0

    @pl.when(kv_guard)
    def _():
        kt = jnp.dot(wk_ref[...], xkt_ref[0], preferred_element_type=f32) + bk_ref[...]
        kt_scr[...] = kt                       # f32: keeps per-head sublane slices 8-aligned
        v = jnp.dot(xv_ref[0], wvt_ref[...], preferred_element_type=f32) + bv_ref[...]
        v_scr[...] = v.astype(bf16)

    # ---- init the output block (resident across the head axis) with the fc bias.
    @pl.when(hh == 0)
    def _():
        out_ref[0] = jnp.broadcast_to(bfc_ref[...], (TQ, d))

    # ---- per-head Q projection (1/sqrt(dh) already folded into Wq/bq).
    q_h = (jnp.dot(xq_ref[0], wq_ref[hh], preferred_element_type=f32)
           + bq_ref[hh]).astype(bf16)                                    # (TQ, dh)

    # ---- relative logits: QE -> precomputed mask -> skew (one static strided XLU roll).
    # E^T for this tile is pre-rolled by qi*TQ in the wrapper, and the mask is the
    # matching per-row shifted _qe_masking, so row i only needs a roll of P-M+1+i.
    qe = jnp.dot(q_h, et_ref[0], preferred_element_type=f32)            # (TQ, P)
    qe = qe * mask_ref[...]
    srel = pltpu.roll(qe, P - M + 1, 1, stride=1, stride_axis=0)[:, :L]  # (TQ, L)

    # ---- content logits: Q K^T using the cached K^T slab (per-head sublane slice).
    off = pl.multiple_of(hh * dh, dh)
    k_ht = kt_scr[pl.ds(off, dh), :].astype(bf16)                        # (dh, L)
    qkt = jnp.dot(q_h, k_ht, preferred_element_type=f32)                 # (TQ, L)

    # ---- softmax (mask=None path of the reference).
    # TODO(synk): optional `mask` argument of the reference forward not plumbed.
    logits = qkt + srel
    mx = jnp.max(logits, axis=-1, keepdims=True)
    ex = jnp.exp(logits - mx)
    w = ex * pl.reciprocal(jnp.sum(ex, axis=-1, keepdims=True), approx=True)

    if collect_attn:
        attn_ref[0, 0] = w.astype(attn_ref.dtype)

    # ---- context + output projection.  Using the full V slab and a head-masked
    # Wfc^T keeps both matmuls at full MXU width and avoids any per-head V slicing;
    # the zeroed rows of wfc_ref[hh] cancel the other heads' columns of ctx.
    ctx = jnp.dot(w.astype(bf16), v_scr[...], preferred_element_type=f32)   # (TQ, d)
    out_ref[0] += jnp.dot(ctx.astype(bf16), wfc_ref[hh],
                          preferred_element_type=f32)


# ----------------------------------------------------------------------------------
# Wrapper helpers
# ----------------------------------------------------------------------------------
def _vmem_limit_bytes():
    try:
        cap = int(pltpu.get_tpu_info().vmem_capacity_bytes)
        # leave headroom; v7x has 64 MiB / TensorCore, v5e/v6e have 128 MiB.
        return int(max(32 * 1024 * 1024,
                       min(cap - 8 * 1024 * 1024, 100 * 1024 * 1024)))
    except Exception:
        return 64 * 1024 * 1024


def _pick_tile_q(L, P, tile_q):
    if tile_q is not None:
        assert L % tile_q == 0 and (tile_q % 8 == 0 or tile_q == L)
        return tile_q
    # keep the (TQ, P) f32 relative-logits intermediate around ~4 MiB
    cap = max(8, min(512, (4 * 1024 * 1024) // (4 * max(P, 1))))
    if L <= cap:
        return L
    best = None
    for t in range(8, cap + 1, 8):
        if L % t == 0:
            best = t
    return best if best is not None else L


# ----------------------------------------------------------------------------------
# Wrapper: parameter plumbing + pallas_call
# ----------------------------------------------------------------------------------
def relative_global_attention(xq, xk, xv, params, *, h, max_seq,
                              collect_attn=True, tile_q=None):
    B, L, d = xq.shape
    dh = d // h
    assert h * dh == d
    assert dh % 8 == 0, "head dim must be a multiple of 8 (TPU sublane tiling)"
    assert L <= max_seq
    # TODO(synk): len_k != len_q branch of the reference _skewing and the optional
    # `mask` argument are not implemented (self-attention, mask=None path only).

    start = max(0, max_seq - L)
    E = jnp.asarray(params["E"])[start:, :]          # (M, dh) with M == len_q
    M = E.shape[0]
    assert M == L
    P = max(128, ((M + 127) // 128) * 128)           # lane-padded relative axis

    TQ = _pick_tile_q(L, P, tile_q)
    n_tiles = L // TQ
    # With a single batch element, shard the q-tile axis across TensorCores instead
    # and recompute K/V per tile; otherwise cache K/V once per batch element.
    cache_kv = (B > 1) or (n_tiles == 1)

    bf16, f32 = jnp.bfloat16, jnp.float32
    scale = 1.0 / math.sqrt(dh)

    xq_b = xq.astype(bf16)
    xkt_b = jnp.swapaxes(xk, 1, 2).astype(bf16)      # (B, d, L)
    xv_b = xv.astype(bf16)

    # Per-head Wq slabs with 1/sqrt(dh) folded in (scales both QK^T and Srel).
    wq_heads = (jnp.asarray(params["Wq"]).T * scale).reshape(d, h, dh) \
        .transpose(1, 0, 2).astype(bf16)             # (h, d, dh)
    bq_heads = (jnp.asarray(params["bq"]) * scale).reshape(h, 1, dh).astype(f32)

    wk = jnp.asarray(params["Wk"]).astype(bf16)      # (d, d): K^T = Wk @ xk^T
    bk = jnp.asarray(params["bk"]).reshape(d, 1).astype(f32)
    wvt = jnp.asarray(params["Wv"]).T.astype(bf16)   # (d, d): V = xv @ Wv^T
    bv = jnp.asarray(params["bv"]).reshape(1, d).astype(f32)

    # Head-masked Wfc^T stack: row-block hh of Wfc^T kept, all other rows zero.
    wfct = jnp.asarray(params["Wfc"]).T              # (d, d)
    head_of_row = jnp.arange(d) // dh
    sel = head_of_row[None, :, None] == jnp.arange(h)[:, None, None]
    wfc_masked = jnp.where(sel, wfct[None, :, :], 0.0).astype(bf16)   # (h, d, d)
    bfc = jnp.asarray(params["bfc"]).reshape(1, d).astype(f32)

    # E^T zero-padded to P lanes, pre-rolled by qi*TQ per query tile so the in-kernel
    # skew is a single static strided roll.
    et0 = jnp.zeros((dh, P), bf16).at[:, :M].set(E.T.astype(bf16))
    et_tiles = jnp.stack([jnp.roll(et0, qi * TQ, axis=1) for qi in range(n_tiles)], 0)

    # Precomputed _qe_masking mask, shifted per tile to match the pre-rolled E^T.
    rows = np.arange(L)
    s_of_row = (rows // TQ) * TQ
    cols = np.arange(P)
    c = (cols[None, :] - s_of_row[:, None]) % P
    keep = (c >= (M - 1 - rows)[:, None]) & (c <= M - 1)
    qe_mask = jnp.asarray(keep.astype(np.float32))                    # (L, P)

    kernel = functools.partial(rga_kernel, cache_kv, collect_attn)

    const2 = lambda b, qi, hh: (0, 0)
    const3 = lambda b, qi, hh: (0, 0, 0)
    in_specs = [
        pl.BlockSpec((1, TQ, d), lambda b, qi, hh: (b, qi, 0)),   # xq tile
        pl.BlockSpec((1, d, L), lambda b, qi, hh: (b, 0, 0)),     # xk^T (per batch)
        pl.BlockSpec((1, L, d), lambda b, qi, hh: (b, 0, 0)),     # xv   (per batch)
        pl.BlockSpec((h, d, dh), const3),                         # Wq heads (resident)
        pl.BlockSpec((h, 1, dh), const3),                         # bq heads (resident)
        pl.BlockSpec((d, d), const2),                             # Wk       (resident)
        pl.BlockSpec((d, 1), const2),                             # bk       (resident)
        pl.BlockSpec((d, d), const2),                             # Wv^T     (resident)
        pl.BlockSpec((1, d), const2),                             # bv       (resident)
        pl.BlockSpec((h, d, d), const3),                          # Wfc^T head-masked
        pl.BlockSpec((1, d), const2),                             # bfc      (resident)
        pl.BlockSpec((1, dh, P), lambda b, qi, hh: (qi, 0, 0)),   # pre-rolled E^T / tile
        pl.BlockSpec((TQ, P), lambda b, qi, hh: (qi, 0)),         # QE mask tile
    ]

    out_shape = [jax.ShapeDtypeStruct((B, L, d), f32)]
    out_specs = [pl.BlockSpec((1, TQ, d), lambda b, qi, hh: (b, qi, 0))]
    if collect_attn:
        out_shape.append(jax.ShapeDtypeStruct((B, h, L, L), bf16))
        out_specs.append(pl.BlockSpec((1, 1, TQ, L), lambda b, qi, hh: (b, hh, qi, 0)))

    dim_sem = ("parallel",
               "arbitrary" if cache_kv else "parallel",
               "arbitrary")

    outs = pl.pallas_call(
        kernel,
        out_shape=tuple(out_shape),
        grid=(B, n_tiles, h),
        in_specs=in_specs,
        out_specs=tuple(out_specs),
        scratch_shapes=[pltpu.VMEM((d, L), f32),      # K^T cache
                        pltpu.VMEM((L, d), bf16)],    # V cache
        compiler_params=pltpu.CompilerParams(
            dimension_semantics=dim_sem,
            vmem_limit_bytes=_vmem_limit_bytes()),
    )(xq_b, xkt_b, xv_b, wq_heads, bq_heads, wk, bk, wvt, bv,
      wfc_masked, bfc, et_tiles, qe_mask)

    if collect_attn:
        return outs[0], outs[1]
    return outs[0], None


# ----------------------------------------------------------------------------------
# Pure-JAX reference replicating the torch forward op-for-op (for verification)
# ----------------------------------------------------------------------------------
def reference_forward(xq, xk, xv, params, *, h, max_seq):
    B, L, d = xq.shape
    dh = d // h

    def linear(x, W, b):
        return jnp.dot(x, W.T) + b

    q = linear(xq, params["Wq"], params["bq"]).reshape(B, L, h, dh).transpose(0, 2, 1, 3)
    k = linear(xk, params["Wk"], params["bk"]).reshape(B, L, h, dh).transpose(0, 2, 1, 3)
    v = linear(xv, params["Wv"], params["bv"]).reshape(B, L, h, dh).transpose(0, 2, 1, 3)

    start = max(0, max_seq - L)
    E = params["E"][start:, :]
    QE = jnp.einsum("bhld,md->bhlm", q, E)
    M = QE.shape[-1]
    lengths = jnp.arange(M - 1, M - L - 1, -1)
    keep = ~(jnp.arange(M)[None, :] < lengths[:, None])        # _qe_masking
    QE = QE * keep.astype(QE.dtype)
    padded = jnp.pad(QE, ((0, 0), (0, 0), (0, 0), (1, 0)))     # _skewing
    reshaped = padded.reshape(B, h, M + 1, L)
    Srel = reshaped[:, :, 1:, :]
    QKt = jnp.einsum("bhld,bhmd->bhlm", q, k)
    logits = (QKt + Srel) / math.sqrt(dh)
    w = jax.nn.softmax(logits, axis=-1)
    attn = jnp.einsum("bhlm,bhmd->bhld", w, v)
    out = attn.transpose(0, 2, 1, 3).reshape(B, L, d)
    out = linear(out, params["Wfc"], params["bfc"])
    return out, w


def _make_params(key, d, h, max_seq):
    dh = d // h
    keys = jax.random.split(key, 9)
    s = 1.0 / math.sqrt(d)
    return {
        "Wq": jax.random.normal(keys[0], (d, d), jnp.float32) * s,
        "bq": jax.random.normal(keys[1], (d,), jnp.float32) * 0.1,
        "Wk": jax.random.normal(keys[2], (d, d), jnp.float32) * s,
        "bk": jax.random.normal(keys[3], (d,), jnp.float32) * 0.1,
        "Wv": jax.random.normal(keys[4], (d, d), jnp.float32) * s,
        "bv": jax.random.normal(keys[5], (d,), jnp.float32) * 0.1,
        "Wfc": jax.random.normal(keys[6], (d, d), jnp.float32) * s,
        "bfc": jax.random.normal(keys[7], (d,), jnp.float32) * 0.1,
        "E": jax.random.normal(keys[8], (max_seq, dh), jnp.float32),
    }


# ----------------------------------------------------------------------------------
if __name__ == "__main__":
    d, h = 32, 4

    # Case 1: batch > 1, single query tile, cached K/V, attention weights collected.
    B, L, max_seq = 2, 8, 32
    key = jax.random.PRNGKey(0)
    k_in, k_par = jax.random.split(key)
    kq, kk, kv = jax.random.split(k_in, 3)
    xq = jax.random.normal(kq, (B, L, d), jnp.float32)
    xk = jax.random.normal(kk, (B, L, d), jnp.float32)
    xv = jax.random.normal(kv, (B, L, d), jnp.float32)
    params = _make_params(k_par, d, h, max_seq)

    out, attn = relative_global_attention(xq, xk, xv, params, h=h, max_seq=max_seq)
    jax.block_until_ready((out, attn))
    ref_out, ref_attn = reference_forward(xq, xk, xv, params, h=h, max_seq=max_seq)
    np.testing.assert_allclose(np.asarray(out), np.asarray(ref_out), rtol=5e-2, atol=5e-2)
    np.testing.assert_allclose(np.asarray(attn.astype(jnp.float32)), np.asarray(ref_attn),
                               rtol=5e-2, atol=5e-2)

    # Production path: no dense attention-weights output.
    out2, _ = relative_global_attention(xq, xk, xv, params, h=h, max_seq=max_seq,
                                        collect_attn=False)
    jax.block_until_ready(out2)
    np.testing.assert_allclose(np.asarray(out2), np.asarray(ref_out), rtol=5e-2, atol=5e-2)

    # Case 2: batch == 1 with two query tiles (exercises the pre-rolled-E^T /
    # shifted-mask skew and the recompute-K/V-per-tile megacore path).
    B2, L2, max_seq2 = 1, 16, 16
    key2 = jax.random.PRNGKey(0)
    k_in2, k_par2 = jax.random.split(key2)
    kq2, kk2, kv2 = jax.random.split(k_in2, 3)
    xq2 = jax.random.normal(kq2, (B2, L2, d), jnp.float32)
    xk2 = jax.random.normal(kk2, (B2, L2, d), jnp.float32)
    xv2 = jax.random.normal(kv2, (B2, L2, d), jnp.float32)
    params2 = _make_params(k_par2, d, h, max_seq2)

    out3, attn3 = relative_global_attention(xq2, xk2, xv2, params2, h=h,
                                            max_seq=max_seq2, tile_q=8)
    jax.block_until_ready((out3, attn3))
    ref_out3, ref_attn3 = reference_forward(xq2, xk2, xv2, params2, h=h, max_seq=max_seq2)
    np.testing.assert_allclose(np.asarray(out3), np.asarray(ref_out3), rtol=5e-2, atol=5e-2)
    np.testing.assert_allclose(np.asarray(attn3.astype(jnp.float32)), np.asarray(ref_attn3),
                               rtol=5e-2, atol=5e-2)

    print("KERNEL_OK")
</pallas_src>

<mosaic_0001>
module attributes {stable_mosaic.version = 11 : i64} {
  func.func @rga_kernel(%arg0: i32, %arg1: i32, %arg2: i32, %arg3: memref<1x8x32xbf16, #tpu.memory_space<vmem>>, %arg4: memref<1x32x8xbf16, #tpu.memory_space<vmem>>, %arg5: memref<1x8x32xbf16, #tpu.memory_space<vmem>>, %arg6: memref<4x32x8xbf16, #tpu.memory_space<vmem>>, %arg7: memref<4x1x8xf32, #tpu.memory_space<vmem>>, %arg8: memref<32x32xbf16, #tpu.memory_space<vmem>>, %arg9: memref<32x1xf32, #tpu.memory_space<vmem>>, %arg10: memref<32x32xbf16, #tpu.memory_space<vmem>>, %arg11: memref<1x32xf32, #tpu.memory_space<vmem>>, %arg12: memref<4x32x32xbf16, #tpu.memory_space<vmem>>, %arg13: memref<1x32xf32, #tpu.memory_space<vmem>>, %arg14: memref<1x8x128xbf16, #tpu.memory_space<vmem>>, %arg15: memref<8x128xf32, #tpu.memory_space<vmem>>, %arg16: memref<1x8x32xf32, #tpu.memory_space<vmem>>, %arg17: memref<1x1x8x8xbf16, #tpu.memory_space<vmem>>, %arg18: memref<32x8xf32, #tpu.memory_space<vmem>>, %arg19: memref<8x32xbf16, #tpu.memory_space<vmem>>) attributes {dimension_semantics = [#tpu.dimension_semantics<parallel>, #tpu.dimension_semantics<arbitrary>, #tpu.dimension_semantics<arbitrary>], iteration_bounds = array<i64: 2, 1, 4>, scalar_prefetch = 0 : i64, scratch_operands = 2 : i64, tpu.core_type = #tpu.core_type<tc>, window_params = [{transform_indices = @transform_0, window_bounds = array<i64: 1, 8, 32>}, {transform_indices = @transform_1, window_bounds = array<i64: 1, 32, 8>}, {transform_indices = @transform_2, window_bounds = array<i64: 1, 8, 32>}, {pipeline_mode = #tpu.pipeline_mode<synchronous>, transform_indices = @transform_3, window_bounds = array<i64: 4, 32, 8>}, {pipeline_mode = #tpu.pipeline_mode<synchronous>, transform_indices = @transform_4, window_bounds = array<i64: 4, 1, 8>}, {pipeline_mode = #tpu.pipeline_mode<synchronous>, transform_indices = @transform_5, window_bounds = array<i64: 32, 32>}, {pipeline_mode = #tpu.pipeline_mode<synchronous>, transform_indices = @transform_6, window_bounds = array<i64: 32, 1>}, {pipeline_mode = #tpu.pipeline_mode<synchronous>, transform_indices = @transform_7, window_bounds = array<i64: 32, 32>}, {pipeline_mode = #tpu.pipeline_mode<synchronous>, transform_indices = @transform_8, window_bounds = array<i64: 1, 32>}, {pipeline_mode = #tpu.pipeline_mode<synchronous>, transform_indices = @transform_9, window_bounds = array<i64: 4, 32, 32>}, {pipeline_mode = #tpu.pipeline_mode<synchronous>, transform_indices = @transform_10, window_bounds = array<i64: 1, 32>}, {transform_indices = @transform_11, window_bounds = array<i64: 1, 8, 128>}, {transform_indices = @transform_12, window_bounds = array<i64: 8, 128>}, {transform_indices = @transform_13, window_bounds = array<i64: 1, 8, 32>}, {transform_indices = @transform_14, window_bounds = array<i64: 1, 1, 8, 8>}]} {
    %c0_i32 = arith.constant 0 : i32
    %0 = arith.cmpi eq, %arg2, %c0_i32 : i32
    %c0_i32_0 = arith.constant 0 : i32
    %1 = arith.cmpi eq, %arg1, %c0_i32_0 : i32
    %2 = arith.andi %0, %1 : i1
    %3 = arith.extui %2 : i1 to i32
    %c0_i32_1 = arith.constant 0 : i32
    %4 = arith.cmpi ne, %3, %c0_i32_1 : i32
    scf.if %4 {
      %c0_36 = arith.constant 0 : index
      %c0_37 = arith.constant 0 : index
      %62 = vector.load %arg8[%c0_36, %c0_37] : memref<32x32xbf16, #tpu.memory_space<vmem>>, vector<32x32xbf16>
      %c0_38 = arith.constant 0 : index
      %c0_39 = arith.constant 0 : index
      %c0_40 = arith.constant 0 : index
      %63 = vector.load %arg4[%c0_38, %c0_39, %c0_40] : memref<1x32x8xbf16, #tpu.memory_space<vmem>>, vector<1x32x8xbf16>
      %64 = vector.shape_cast %63 : vector<1x32x8xbf16> to vector<32x8xbf16>
      %cst_41 = arith.constant dense<0.000000e+00> : vector<32x8xf32>
      %65 = tpu.matmul %62, %64, %cst_41 {dimension_numbers = #tpu.dot_dimension_numbers<[1], [0], [0], [1], [0, 0, 1, 1], [], []>} : vector<32x32xbf16>, vector<32x8xbf16>, vector<32x8xf32> -> vector<32x8xf32>
      %c0_42 = arith.constant 0 : index
      %c0_43 = arith.constant 0 : index
      %66 = vector.load %arg9[%c0_42, %c0_43] : memref<32x1xf32, #tpu.memory_space<vmem>>, vector<32x1xf32>
      %67 = vector.broadcast %66 : vector<32x1xf32> to vector<32x8xf32>
      %68 = arith.addf %65, %67 : vector<32x8xf32>
      %c0_44 = arith.constant 0 : index
      %c0_45 = arith.constant 0 : index
      %69 = vector.load %arg18[%c0_44, %c0_45] : memref<32x8xf32, #tpu.memory_space<vmem>>, vector<32x8xf32>
      tpu.vector_store %arg18[%c0_44, %c0_45], %68 {strides = array<i32>} : memref<32x8xf32, #tpu.memory_space<vmem>>, vector<32x8xf32>,
      %c0_46 = arith.constant 0 : index
      %c0_47 = arith.constant 0 : index
      %c0_48 = arith.constant 0 : index
      %70 = vector.load %arg5[%c0_46, %c0_47, %c0_48] : memref<1x8x32xbf16, #tpu.memory_space<vmem>>, vector<1x8x32xbf16>
      %71 = vector.shape_cast %70 : vector<1x8x32xbf16> to vector<8x32xbf16>
      %c0_49 = arith.constant 0 : index
      %c0_50 = arith.constant 0 : index
      %72 = vector.load %arg10[%c0_49, %c0_50] : memref<32x32xbf16, #tpu.memory_space<vmem>>, vector<32x32xbf16>
      %cst_51 = arith.constant dense<0.000000e+00> : vector<8x32xf32>
      %73 = tpu.matmul %71, %72, %cst_51 {dimension_numbers = #tpu.dot_dimension_numbers<[1], [0], [0], [1], [0, 0, 1, 1], [], []>} : vector<8x32xbf16>, vector<32x32xbf16>, vector<8x32xf32> -> vector<8x32xf32>
      %c0_52 = arith.constant 0 : index
      %c0_53 = arith.constant 0 : index
      %74 = vector.load %arg11[%c0_52, %c0_53] : memref<1x32xf32, #tpu.memory_space<vmem>>, vector<1x32xf32>
      %75 = vector.broadcast %74 : vector<1x32xf32> to vector<8x32xf32>
      %76 = arith.addf %73, %75 : vector<8x32xf32>
      %77 = arith.truncf %76 : vector<8x32xf32> to vector<8x32xbf16>
      %c0_54 = arith.constant 0 : index
      %c0_55 = arith.constant 0 : index
      %78 = vector.load %arg19[%c0_54, %c0_55] : memref<8x32xbf16, #tpu.memory_space<vmem>>, vector<8x32xbf16>
      tpu.vector_store %arg19[%c0_54, %c0_55], %77 {strides = array<i32>} : memref<8x32xbf16, #tpu.memory_space<vmem>>, vector<8x32xbf16>,
    } else {
    }
    %c0_i32_2 = arith.constant 0 : i32
    %5 = arith.cmpi eq, %arg2, %c0_i32_2 : i32
    %6 = arith.extui %5 : i1 to i32
    %c0_i32_3 = arith.constant 0 : i32
    %7 = arith.cmpi ne, %6, %c0_i32_3 : i32
    scf.if %7 {
      %c0_36 = arith.constant 0 : index
      %c0_37 = arith.constant 0 : index
      %62 = vector.load %arg13[%c0_36, %c0_37] : memref<1x32xf32, #tpu.memory_space<vmem>>, vector<1x32xf32>
      %63 = vector.shape_cast %62 : vector<1x32xf32> to vector<1x32xf32>
      %64 = vector.broadcast %63 : vector<1x32xf32> to vector<8x32xf32>
      %c0_38 = arith.constant 0 : index
      %c0_39 = arith.constant 0 : index
      %c0_40 = arith.constant 0 : index
      %65 = vector.load %arg16[%c0_38, %c0_39, %c0_40] : memref<1x8x32xf32, #tpu.memory_space<vmem>>, vector<1x8x32xf32>
      %66 = vector.shape_cast %65 : vector<1x8x32xf32> to vector<8x32xf32>
      %67 = vector.shape_cast %64 : vector<8x32xf32> to vector<1x8x32xf32>
      tpu.vector_store %arg16[%c0_38, %c0_39, %c0_40], %67 {strides = array<i32>} : memref<1x8x32xf32, #tpu.memory_space<vmem>>, vector<1x8x32xf32>,
    } else {
    }
    %c0 = arith.constant 0 : index
    %c0_4 = arith.constant 0 : index
    %c0_5 = arith.constant 0 : index
    %8 = vector.load %arg3[%c0, %c0_4, %c0_5] : memref<1x8x32xbf16, #tpu.memory_space<vmem>>, vector<1x8x32xbf16>
    %9 = vector.shape_cast %8 : vector<1x8x32xbf16> to vector<8x32xbf16>
    %10 = arith.index_cast %arg2 : i32 to index
    %c0_6 = arith.constant 0 : index
    %c0_7 = arith.constant 0 : index
    %11 = vector.load %arg6[%10, %c0_6, %c0_7] : memref<4x32x8xbf16, #tpu.memory_space<vmem>>, vector<1x32x8xbf16>
    %12 = vector.shape_cast %11 : vector<1x32x8xbf16> to vector<32x8xbf16>
    %cst = arith.constant dense<0.000000e+00> : vector<8x8xf32>
    %13 = tpu.matmul %9, %12, %cst {dimension_numbers = #tpu.dot_dimension_numbers<[1], [0], [0], [1], [0, 0, 1, 1], [], []>} : vector<8x32xbf16>, vector<32x8xbf16>, vector<8x8xf32> -> vector<8x8xf32>
    %14 = arith.index_cast %arg2 : i32 to index
    %c0_8 = arith.constant 0 : index
    %c0_9 = arith.constant 0 : index
    %15 = vector.load %arg7[%14, %c0_8, %c0_9] : memref<4x1x8xf32, #tpu.memory_space<vmem>>, vector<1x1x8xf32>
    %16 = vector.shape_cast %15 : vector<1x1x8xf32> to vector<1x8xf32>
    %17 = vector.broadcast %16 : vector<1x8xf32> to vector<8x8xf32>
    %18 = arith.addf %13, %17 : vector<8x8xf32>
    %19 = arith.truncf %18 : vector<8x8xf32> to vector<8x8xbf16>
    %c0_10 = arith.constant 0 : index
    %c0_11 = arith.constant 0 : index
    %c0_12 = arith.constant 0 : index
    %20 = vector.load %arg14[%c0_10, %c0_11, %c0_12] : memref<1x8x128xbf16, #tpu.memory_space<vmem>>, vector<1x8x128xbf16>
    %21 = vector.shape_cast %20 : vector<1x8x128xbf16> to vector<8x128xbf16>
    %cst_13 = arith.constant dense<0.000000e+00> : vector<8x128xf32>
    %22 = tpu.matmul %19, %21, %cst_13 {dimension_numbers = #tpu.dot_dimension_numbers<[1], [0], [0], [1], [0, 0, 1, 1], [], []>} : vector<8x8xbf16>, vector<8x128xbf16>, vector<8x128xf32> -> vector<8x128xf32>
    %c0_14 = arith.constant 0 : index
    %c0_15 = arith.constant 0 : index
    %23 = vector.load %arg15[%c0_14, %c0_15] : memref<8x128xf32, #tpu.memory_space<vmem>>, vector<8x128xf32>
    %24 = arith.mulf %22, %23 : vector<8x128xf32>
    %c121_i32 = arith.constant 121 : i32
    %25 = tpu.dynamic_rotate %24 by %c121_i32 dim 1 {stride = 1 : si32, stride_dimension = 0 : si32} : vector<8x128xf32>, i32 -> vector<8x128xf32>
    %26 = vector.extract_strided_slice %25 {offsets = [0, 0], sizes = [8, 8], strides = [1, 1]} : vector<8x128xf32> to vector<8x8xf32>
    %c8_i32 = arith.constant 8 : i32
    %27 = arith.muli %arg2, %c8_i32 : i32
    %28 = tpu.assume_multiple %27, 8 : i32
    %29 = arith.index_cast %28 : i32 to index
    %c0_16 = arith.constant 0 : index
    %30 = vector.load %arg18[%29, %c0_16] : memref<32x8xf32, #tpu.memory_space<vmem>>, vector<8x8xf32>
    %31 = arith.truncf %30 : vector<8x8xf32> to vector<8x8xbf16>
    %cst_17 = arith.constant dense<0.000000e+00> : vector<8x8xf32>
    %32 = tpu.matmul %19, %31, %cst_17 {dimension_numbers = #tpu.dot_dimension_numbers<[1], [0], [0], [1], [0, 0, 1, 1], [], []>} : vector<8x8xbf16>, vector<8x8xbf16>, vector<8x8xf32> -> vector<8x8xf32>
    %33 = arith.addf %32, %26 : vector<8x8xf32>
    %cst_18 = arith.constant dense<0xFF800000> : vector<8xf32>
    %34 = vector.multi_reduction <maximumf>, %33, %cst_18 [1] : vector<8x8xf32> to vector<8xf32>
    %35 = vector.shape_cast %34 : vector<8xf32> to vector<8x1xf32>
    %36 = vector.broadcast %35 : vector<8x1xf32> to vector<8x8xf32>
    %37 = arith.subf %33, %36 : vector<8x8xf32>
    %38 = math.exp %37 : vector<8x8xf32>
    %cst_19 = arith.constant dense<0.000000e+00> : vector<8xf32>
    %39 = vector.multi_reduction <add>, %38, %cst_19 [1] : vector<8x8xf32> to vector<8xf32>
    %40 = vector.shape_cast %39 : vector<8xf32> to vector<8x1xf32>
    %41 = tpu.reciprocal %40 {approx = true} : vector<8x1xf32> -> vector<8x1xf32>
    %42 = vector.broadcast %41 : vector<8x1xf32> to vector<8x8xf32>
    %43 = arith.mulf %38, %42 : vector<8x8xf32>
    %44 = arith.truncf %43 : vector<8x8xf32> to vector<8x8xbf16>
    %c0_20 = arith.constant 0 : index
    %c0_21 = arith.constant 0 : index
    %c0_22 = arith.constant 0 : index
    %c0_23 = arith.constant 0 : index
    %45 = vector.load %arg17[%c0_20, %c0_21, %c0_22, %c0_23] : memref<1x1x8x8xbf16, #tpu.memory_space<vmem>>, vector<1x1x8x8xbf16>
    %46 = vector.shape_cast %45 : vector<1x1x8x8xbf16> to vector<8x8xbf16>
    %47 = vector.shape_cast %44 : vector<8x8xbf16> to vector<1x1x8x8xbf16>
    tpu.vector_store %arg17[%c0_20, %c0_21, %c0_22, %c0_23], %47 {strides = array<i32>} : memref<1x1x8x8xbf16, #tpu.memory_space<vmem>>, vector<1x1x8x8xbf16>,
    %48 = arith.truncf %43 : vector<8x8xf32> to vector<8x8xbf16>
    %c0_24 = arith.constant 0 : index
    %c0_25 = arith.constant 0 : index
    %49 = vector.load %arg19[%c0_24, %c0_25] : memref<8x32xbf16, #tpu.memory_space<vmem>>, vector<8x32xbf16>
    %cst_26 = arith.constant dense<0.000000e+00> : vector<8x32xf32>
    %50 = tpu.matmul %48, %49, %cst_26 {dimension_numbers = #tpu.dot_dimension_numbers<[1], [0], [0], [1], [0, 0, 1, 1], [], []>} : vector<8x8xbf16>, vector<8x32xbf16>, vector<8x32xf32> -> vector<8x32xf32>
    %c0_27 = arith.constant 0 : index
    %c0_28 = arith.constant 0 : index
    %c0_29 = arith.constant 0 : index
    %51 = vector.load %arg16[%c0_27, %c0_28, %c0_29] : memref<1x8x32xf32, #tpu.memory_space<vmem>>, vector<1x8x32xf32>
    %52 = vector.shape_cast %51 : vector<1x8x32xf32> to vector<8x32xf32>
    %53 = arith.truncf %50 : vector<8x32xf32> to vector<8x32xbf16>
    %54 = arith.index_cast %arg2 : i32 to index
    %c0_30 = arith.constant 0 : index
    %c0_31 = arith.constant 0 : index
    %55 = vector.load %arg12[%54, %c0_30, %c0_31] : memref<4x32x32xbf16, #tpu.memory_space<vmem>>, vector<1x32x32xbf16>
    %56 = vector.shape_cast %55 : vector<1x32x32xbf16> to vector<32x32xbf16>
    %cst_32 = arith.constant dense<0.000000e+00> : vector<8x32xf32>
    %57 = tpu.matmul %53, %56, %cst_32 {dimension_numbers = #tpu.dot_dimension_numbers<[1], [0], [0], [1], [0, 0, 1, 1], [], []>} : vector<8x32xbf16>, vector<32x32xbf16>, vector<8x32xf32> -> vector<8x32xf32>
    %58 = arith.addf %52, %57 : vector<8x32xf32>
    %c0_33 = arith.constant 0 : index
    %c0_34 = arith.constant 0 : index
    %c0_35 = arith.constant 0 : index
    %59 = vector.load %arg16[%c0_33, %c0_34, %c0_35] : memref<1x8x32xf32, #tpu.memory_space<vmem>>, vector<1x8x32xf32>
    %60 = vector.shape_cast %59 : vector<1x8x32xf32> to vector<8x32xf32>
    %61 = vector.shape_cast %58 : vector<8x32xf32> to vector<1x8x32xf32>
    tpu.vector_store %arg16[%c0_33, %c0_34, %c0_35], %61 {strides = array<i32>} : memref<1x8x32xf32, #tpu.memory_space<vmem>>, vector<1x8x32xf32>,
    return
  }
  func.func @transform_0(%arg0: i32, %arg1: i32, %arg2: i32) -> (i32, i32, i32) {
    %c0_i32 = arith.constant 0 : i32
    %c0_i32_0 = arith.constant 0 : i32
    return %arg0, %arg1, %c0_i32 : i32, i32, i32
  }
  func.func @transform_1(%arg0: i32, %arg1: i32, %arg2: i32) -> (i32, i32, i32) {
    %c0_i32 = arith.constant 0 : i32
    %c0_i32_0 = arith.constant 0 : i32
    %c0_i32_1 = arith.constant 0 : i32
    return %arg0, %c0_i32, %c0_i32_0 : i32, i32, i32
  }
  func.func @transform_2(%arg0: i32, %arg1: i32, %arg2: i32) -> (i32, i32, i32) {
    %c0_i32 = arith.constant 0 : i32
    %c0_i32_0 = arith.constant 0 : i32
    %c0_i32_1 = arith.constant 0 : i32
    return %arg0, %c0_i32, %c0_i32_0 : i32, i32, i32
  }
  func.func @transform_3(%arg0: i32, %arg1: i32, %arg2: i32) -> (i32, i32, i32) {
    %c0_i32 = arith.constant 0 : i32
    %c0_i32_0 = arith.constant 0 : i32
    %c0_i32_1 = arith.constant 0 : i32
    %c0_i32_2 = arith.constant 0 : i32
    return %c0_i32, %c0_i32_0, %c0_i32_1 : i32, i32, i32
  }
  func.func @transform_4(%arg0: i32, %arg1: i32, %arg2: i32) -> (i32, i32, i32) {
    %c0_i32 = arith.constant 0 : i32
    %c0_i32_0 = arith.constant 0 : i32
    %c0_i32_1 = arith.constant 0 : i32
    %c0_i32_2 = arith.constant 0 : i32
    return %c0_i32, %c0_i32_0, %c0_i32_1 : i32, i32, i32
  }
  func.func @transform_5(%arg0: i32, %arg1: i32, %arg2: i32) -> (i32, i32) {
    %c0_i32 = arith.constant 0 : i32
    %c0_i32_0 = arith.constant 0 : i32
    %c0_i32_1 = arith.constant 0 : i32
    return %c0_i32, %c0_i32_0 : i32, i32
  }
  func.func @transform_6(%arg0: i32, %arg1: i32, %arg2: i32) -> (i32, i32) {
    %c0_i32 = arith.constant 0 : i32
    %c0_i32_0 = arith.constant 0 : i32
    %c0_i32_1 = arith.constant 0 : i32
    return %c0_i32, %c0_i32_0 : i32, i32
  }
  func.func @transform_7(%arg0: i32, %arg1: i32, %arg2: i32) -> (i32, i32) {
    %c0_i32 = arith.constant 0 : i32
    %c0_i32_0 = arith.constant 0 : i32
    %c0_i32_1 = arith.constant 0 : i32
    return %c0_i32, %c0_i32_0 : i32, i32
  }
  func.func @transform_8(%arg0: i32, %arg1: i32, %arg2: i32) -> (i32, i32) {
    %c0_i32 = arith.constant 0 : i32
    %c0_i32_0 = arith.constant 0 : i32
    %c0_i32_1 = arith.constant 0 : i32
    return %c0_i32, %c0_i32_0 : i32, i32
  }
  func.func @transform_9(%arg0: i32, %arg1: i32, %arg2: i32) -> (i32, i32, i32) {
    %c0_i32 = arith.constant 0 : i32
    %c0_i32_0 = arith.constant 0 : i32
    %c0_i32_1 = arith.constant 0 : i32
    %c0_i32_2 = arith.constant 0 : i32
    return %c0_i32, %c0_i32_0, %c0_i32_1 : i32, i32, i32
  }
  func.func @transform_10(%arg0: i32, %arg1: i32, %arg2: i32) -> (i32, i32) {
    %c0_i32 = arith.constant 0 : i32
    %c0_i32_0 = arith.constant 0 : i32
    %c0_i32_1 = arith.constant 0 : i32
    return %c0_i32, %c0_i32_0 : i32, i32
  }
  func.func @transform_11(%arg0: i32, %arg1: i32, %arg2: i32) -> (i32, i32, i32) {
    %c0_i32 = arith.constant 0 : i32
    %c0_i32_0 = arith.constant 0 : i32
    %c0_i32_1 = arith.constant 0 : i32
    return %arg1, %c0_i32, %c0_i32_0 : i32, i32, i32
  }
  func.func @transform_12(%arg0: i32, %arg1: i32, %arg2: i32) -> (i32, i32) {
    %c0_i32 = arith.constant 0 : i32
    %c0_i32_0 = arith.constant 0 : i32
    return %arg1, %c0_i32 : i32, i32
  }
  func.func @transform_13(%arg0: i32, %arg1: i32, %arg2: i32) -> (i32, i32, i32) {
    %c0_i32 = arith.constant 0 : i32
    %c0_i32_0 = arith.constant 0 : i32
    return %arg0, %arg1, %c0_i32 : i32, i32, i32
  }
  func.func @transform_14(%arg0: i32, %arg1: i32, %arg2: i32) -> (i32, i32, i32, i32) {
    %c0_i32 = arith.constant 0 : i32
    %c0_i32_0 = arith.constant 0 : i32
    return %arg0, %arg2, %arg1, %c0_i32 : i32, i32, i32, i32
  }
}

</mosaic_0001>

<llo_original>
// kernel: tpu_custom_call.1
$region0: #{tpu_custom_call.1}
  #allocation0 [shape = 'u32[]', space=smem, size = 0x4, offset = 0x4, fixed_abs, tag = 'smem constant byte address 0x4 - core index']
  #allocation1 [shape = 'u32[144,128]{1,0:T(1,128)}', space=vmem, size = 0x12000, scoped, tag = 'internal scratch']
  #allocation2 [shape = 'f32[32,8]{1,0:T(8,128)}', space=vmem, size = 0x4000, scoped, tag = 'scratch operand']
  #allocation3 [shape = 'bf16[8,32]{1,0:T(8,128)(2,1)}', space=vmem, size = 0x800, scoped, tag = 'scratch operand']
  %s0 = inlined_call_operand.vmem [shape: bf16[2,8,32], index: 0, kind: input, shape index: {}]
  %s1 = inlined_call_operand.vmem [shape: bf16[2,32,8], index: 1, kind: input, shape index: {}]
  %s2 = inlined_call_operand.vmem [shape: bf16[2,8,32], index: 2, kind: input, shape index: {}]
  %s3 = inlined_call_operand.vmem [shape: bf16[4,32,8], index: 3, kind: input, shape index: {}]
  %s4 = inlined_call_operand.vmem [shape: f32[4,1,8], index: 4, kind: input, shape index: {}]
  %s5 = inlined_call_operand.vmem [shape: bf16[32,32], index: 5, kind: input, shape index: {}]
  %s6 = inlined_call_operand.vmem [shape: f32[32,1], index: 6, kind: input, shape index: {}]
  %s7 = inlined_call_operand.vmem [shape: bf16[32,32], index: 7, kind: input, shape index: {}]
  %s8 = inlined_call_operand.vmem [shape: f32[1,32], index: 8, kind: input, shape index: {}]
  %s9 = inlined_call_operand.vmem [shape: bf16[4,32,32], index: 9, kind: input, shape index: {}]
  %s10 = inlined_call_operand.vmem [shape: f32[1,32], index: 10, kind: input, shape index: {}]
  %s11 = inlined_call_operand.vmem [shape: bf16[1,8,128], index: 11, kind: input, shape index: {}]
  %s12 = inlined_call_operand.vmem [shape: f32[8,128], index: 12, kind: input, shape index: {}]
  %s13 = inlined_call_operand.hbm [shape: f32[2,8,32], index: 13, kind: output, shape index: {0}]
  %s14 = inlined_call_operand.hbm [shape: bf16[2,4,8,8], index: 14, kind: output, shape index: {1}]
  %15 = xla_tuple %s13, %s14
  %s16 = sld [smem:[#allocation0]]
  $region101: #{tpu_custom_call.1} parent=0
    _
  %s18 = ssub.s32 1, %s16
  %s19 = scalar_select 0, %s18, %s16
  $region1: #{tpu_custom_call.1} parent=0
    #allocation4 [shape = 'u8[8192]{0}', space=vmem, size = 0x2000, scoped, tag = 'output window, operand 0']
    #allocation5 [shape = 's32[2]{0}', space=sflag, size = 0x8, scoped, tag = 'scoped memory for tpu_custom_call.1']
    #allocation6 [shape = 'u8[4096]{0}', space=vmem, size = 0x1000, scoped, tag = 'output window, operand 1']
    #allocation7 [shape = 's32[2]{0}', space=sflag, size = 0x8, scoped, tag = 'scoped memory for tpu_custom_call.1']
    %20 = vsyncpa [#allocation5], 0
    %s21 = scalar_lea.sflag [#allocation5], 1
    %22 = vsyncpa %s21, 0
    %23 = vsyncpa [#allocation7], 0
    %s24 = scalar_lea.sflag [#allocation7], 1
    %25 = vsyncpa %s24, 0
    loop: start=0, step=1, limit=10
    $region2: #{tpu_custom_call.1} parent=1 // loop_pre_header
      _
    $region3: #{tpu_custom_call.1} parent=1 // loop_header
      %s27 = sphi 0, %s31
      %p28 = scmp.ge.s32.totalorder %s27, 10
      %s34 = sphi 0, %s53
      %s35 = sphi 0, %s49
      %s36 = sphi 0, %s45
      %s37 = sphi 0, %s34
      %s38 = sphi 0, %s35
      %s39 = sphi 0, %s36
      %s40 = sphi 0, %s37
      %s41 = sphi 0, %s38
      %s42 = sphi 0, %s39
      %s58 = sphi 0, %s60
      %s61 = sphi 0, %s58
      %s62 = sphi 0, %s61
      %s78 = sphi 0, %s62
      %s84 = sphi 0, %s86
      %s87 = sphi 0, %s84
      %s88 = sphi 0, %s87
      %s104 = sphi 0, %s88
      %s110 = sphi 0, %s112
      %s113 = sphi 0, %s110
      %s114 = sphi 0, %s113
      %s130 = sphi 0, %s114
      %s134 = sphi 0, %s134
      %s136 = sphi 0, %s134
      %s137 = sphi 0, %s136
      %s151 = sphi 0, %s137
      %s155 = sphi 0, %s155
      %s157 = sphi 0, %s155
      %s158 = sphi 0, %s157
      %s172 = sphi 0, %s158
      %s176 = sphi 0, %s176
      %s178 = sphi 0, %s176
      %s179 = sphi 0, %s178
      %s193 = sphi 0, %s179
      %s197 = sphi 0, %s197
      %s199 = sphi 0, %s197
      %s200 = sphi 0, %s199
      %s214 = sphi 0, %s200
      %s218 = sphi 0, %s218
      %s220 = sphi 0, %s218
      %s221 = sphi 0, %s220
      %s235 = sphi 0, %s221
      %s239 = sphi 0, %s239
      %s241 = sphi 0, %s239
      %s242 = sphi 0, %s241
      %s256 = sphi 0, %s242
      %s260 = sphi 0, %s260
      %s262 = sphi 0, %s260
      %s263 = sphi 0, %s262
      %s277 = sphi 0, %s263
      %s281 = sphi 0, %s281
      %s283 = sphi 0, %s281
      %s284 = sphi 0, %s283
      %s298 = sphi 0, %s284
      %s304 = sphi 0, %s306
      %s307 = sphi 0, %s304
      %s308 = sphi 0, %s307
      %s324 = sphi 0, %s308
      %s330 = sphi 0, %s332
      %s333 = sphi 0, %s330
      %s334 = sphi 0, %s333
      %s350 = sphi 0, %s334
      %s358 = sphi 0, %s360
      %s361 = sphi 0, %s358
      %s362 = sphi 0, %s361
      %s378 = sphi 0, %s362
      %s388 = sphi 0, %s390
      %s391 = sphi 0, %s388
      %s392 = sphi 0, %s391
      %s408 = sphi 0, %s392
    $region4: #{tpu_custom_call.1} parent=1 // loop_header_branch
      %30 = sbr.rel (%p28) target = $region8
    $region5: #{tpu_custom_call.1} parent=1 // loop_body
      %s32 = ssub.s32 %s27, 1
      %s33 = ssub.s32 %s27, 2
      %s43 = sadd.s32 1, %s36
      %p44 = scmp.ge.s32.totalorder %s43, 4
      %s45 = scalar_select %p44, 0, %s43
      %s46 = sadd.s32 1, %s35
      %s47 = scalar_select %p44, %s46, %s35
      %p48 = scmp.ge.s32.totalorder %s47, 1
      %s49 = scalar_select %p48, 0, %s47
      %s50 = sadd.s32 1, %s34
      %s51 = scalar_select %p48, %s50, %s34
      %p52 = scmp.ge.s32.totalorder %s51, 2
      %s53 = scalar_select %p52, 0, %s51
      %s54 = ssub.s32 %s34, %s53
      %s55 = ssub.s32 %s35, %s49
      %s56 = sor.u32 %s54, %s55
      %p57 = scmp.eq.s32.totalorder %s56, 0
      %s59 = sadd.s32 %s58, 1
      %s60 = scalar_select %p57, %s58, %s59
      %p63 = pneg %p57
      %p64 = scmp.eq.s32.totalorder %s27, 7
      %p65 = por %p63, %p64
      %p66 = scmp.ne.s32.totalorder %s58, %s61
      %p67 = scmp.eq.s32.totalorder %s27, 0
      %p68 = por %p66, %p67
      %p69 = scmp.ne.s32.totalorder %s58, %s61
      %p70 = scmp.eq.s32.totalorder %s32, 7
      %p71 = por %p69, %p70
      %p72 = scmp.ne.s32.totalorder %s61, %s62
      %p73 = scmp.eq.s32.totalorder %s32, 0
      %p74 = por %p72, %p73
      %p75 = scmp.ne.s32.totalorder %s61, %s62
      %p76 = scmp.eq.s32.totalorder %s33, 7
      %p77 = por %p75, %p76
      %p79 = scmp.ne.s32.totalorder %s62, %s78
      %p80 = scmp.eq.s32.totalorder %s33, 0
      %p81 = por %p79, %p80
      %s82 = ssub.s32 %s34, %s53
      %p83 = scmp.eq.s32.totalorder %s82, 0
      %s85 = sadd.s32 %s84, 1
      %s86 = scalar_select %p83, %s84, %s85
      %p89 = pneg %p83
      %p90 = scmp.eq.s32.totalorder %s27, 7
      %p91 = por %p89, %p90
      %p92 = scmp.ne.s32.totalorder %s84, %s87
      %p93 = scmp.eq.s32.totalorder %s27, 0
      %p94 = por %p92, %p93
      %p95 = scmp.ne.s32.totalorder %s84, %s87
      %p96 = scmp.eq.s32.totalorder %s32, 7
      %p97 = por %p95, %p96
      %p98 = scmp.ne.s32.totalorder %s87, %s88
      %p99 = scmp.eq.s32.totalorder %s32, 0
      %p100 = por %p98, %p99
      %p101 = scmp.ne.s32.totalorder %s87, %s88
      %p102 = scmp.eq.s32.totalorder %s33, 7
      %p103 = por %p101, %p102
      %p105 = scmp.ne.s32.totalorder %s88, %s104
      %p106 = scmp.eq.s32.totalorder %s33, 0
      %p107 = por %p105, %p106
      %s108 = ssub.s32 %s34, %s53
      %p109 = scmp.eq.s32.totalorder %s108, 0
      %s111 = sadd.s32 %s110, 1
      %s112 = scalar_select %p109, %s110, %s111
      %p115 = pneg %p109
      %p116 = scmp.eq.s32.totalorder %s27, 7
      %p117 = por %p115, %p116
      %p118 = scmp.ne.s32.totalorder %s110, %s113
      %p119 = scmp.eq.s32.totalorder %s27, 0
      %p120 = por %p118, %p119
      %p121 = scmp.ne.s32.totalorder %s110, %s113
      %p122 = scmp.eq.s32.totalorder %s32, 7
      %p123 = por %p121, %p122
      %p124 = scmp.ne.s32.totalorder %s113, %s114
      %p125 = scmp.eq.s32.totalorder %s32, 0
      %p126 = por %p124, %p125
      %p127 = scmp.ne.s32.totalorder %s113, %s114
      %p128 = scmp.eq.s32.totalorder %s33, 7
      %p129 = por %p127, %p128
      %p131 = scmp.ne.s32.totalorder %s114, %s130
      %p132 = scmp.eq.s32.totalorder %s33, 0
      %p133 = por %p131, %p132
      %s135 = sadd.s32 %s134, 1
      %p138 = scmp.eq.s32.totalorder %s27, 7
      %p139 = scmp.ne.s32.totalorder %s134, %s136
      %p140 = scmp.eq.s32.totalorder %s27, 0
      %p141 = por %p139, %p140
      %p142 = scmp.ne.s32.totalorder %s134, %s136
      %p143 = scmp.eq.s32.totalorder %s32, 7
      %p144 = por %p142, %p143
      %p145 = scmp.ne.s32.totalorder %s136, %s137
      %p146 = scmp.eq.s32.totalorder %s32, 0
      %p147 = por %p145, %p146
      %p148 = scmp.ne.s32.totalorder %s136, %s137
      %p149 = scmp.eq.s32.totalorder %s33, 7
      %p150 = por %p148, %p149
      %p152 = scmp.ne.s32.totalorder %s137, %s151
      %p153 = scmp.eq.s32.totalorder %s33, 0
      %p154 = por %p152, %p153
      %s156 = sadd.s32 %s155, 1
      %p159 = scmp.eq.s32.totalorder %s27, 7
      %p160 = scmp.ne.s32.totalorder %s155, %s157
      %p161 = scmp.eq.s32.totalorder %s27, 0
      %p162 = por %p160, %p161
      %p163 = scmp.ne.s32.totalorder %s155, %s157
      %p164 = scmp.eq.s32.totalorder %s32, 7
      %p165 = por %p163, %p164
      %p166 = scmp.ne.s32.totalorder %s157, %s158
      %p167 = scmp.eq.s32.totalorder %s32, 0
      %p168 = por %p166, %p167
      %p169 = scmp.ne.s32.totalorder %s157, %s158
      %p170 = scmp.eq.s32.totalorder %s33, 7
      %p171 = por %p169, %p170
      %p173 = scmp.ne.s32.totalorder %s158, %s172
      %p174 = scmp.eq.s32.totalorder %s33, 0
      %p175 = por %p173, %p174
      %s177 = sadd.s32 %s176, 1
      %p180 = scmp.eq.s32.totalorder %s27, 7
      %p181 = scmp.ne.s32.totalorder %s176, %s178
      %p182 = scmp.eq.s32.totalorder %s27, 0
      %p183 = por %p181, %p182
      %p184 = scmp.ne.s32.totalorder %s176, %s178
      %p185 = scmp.eq.s32.totalorder %s32, 7
      %p186 = por %p184, %p185
      %p187 = scmp.ne.s32.totalorder %s178, %s179
      %p188 = scmp.eq.s32.totalorder %s32, 0
      %p189 = por %p187, %p188
      %p190 = scmp.ne.s32.totalorder %s178, %s179
      %p191 = scmp.eq.s32.totalorder %s33, 7
      %p192 = por %p190, %p191
      %p194 = scmp.ne.s32.totalorder %s179, %s193
      %p195 = scmp.eq.s32.totalorder %s33, 0
      %p196 = por %p194, %p195
      %s198 = sadd.s32 %s197, 1
      %p201 = scmp.eq.s32.totalorder %s27, 7
      %p202 = scmp.ne.s32.totalorder %s197, %s199
      %p203 = scmp.eq.s32.totalorder %s27, 0
      %p204 = por %p202, %p203
      %p205 = scmp.ne.s32.totalorder %s197, %s199
      %p206 = scmp.eq.s32.totalorder %s32, 7
      %p207 = por %p205, %p206
      %p208 = scmp.ne.s32.totalorder %s199, %s200
      %p209 = scmp.eq.s32.totalorder %s32, 0
      %p210 = por %p208, %p209
      %p211 = scmp.ne.s32.totalorder %s199, %s200
      %p212 = scmp.eq.s32.totalorder %s33, 7
      %p213 = por %p211, %p212
      %p215 = scmp.ne.s32.totalorder %s200, %s214
      %p216 = scmp.eq.s32.totalorder %s33, 0
      %p217 = por %p215, %p216
      %s219 = sadd.s32 %s218, 1
      %p222 = scmp.eq.s32.totalorder %s27, 7
      %p223 = scmp.ne.s32.totalorder %s218, %s220
      %p224 = scmp.eq.s32.totalorder %s27, 0
      %p225 = por %p223, %p224
      %p226 = scmp.ne.s32.totalorder %s218, %s220
      %p227 = scmp.eq.s32.totalorder %s32, 7
      %p228 = por %p226, %p227
      %p229 = scmp.ne.s32.totalorder %s220, %s221
      %p230 = scmp.eq.s32.totalorder %s32, 0
      %p231 = por %p229, %p230
      %p232 = scmp.ne.s32.totalorder %s220, %s221
      %p233 = scmp.eq.s32.totalorder %s33, 7
      %p234 = por %p232, %p233
      %p236 = scmp.ne.s32.totalorder %s221, %s235
      %p237 = scmp.eq.s32.totalorder %s33, 0
      %p238 = por %p236, %p237
      %s240 = sadd.s32 %s239, 1
      %p243 = scmp.eq.s32.totalorder %s27, 7
      %p244 = scmp.ne.s32.totalorder %s239, %s241
      %p245 = scmp.eq.s32.totalorder %s27, 0
      %p246 = por %p244, %p245
      %p247 = scmp.ne.s32.totalorder %s239, %s241
      %p248 = scmp.eq.s32.totalorder %s32, 7
      %p249 = por %p247, %p248
      %p250 = scmp.ne.s32.totalorder %s241, %s242
      %p251 = scmp.eq.s32.totalorder %s32, 0
      %p252 = por %p250, %p251
      %p253 = scmp.ne.s32.totalorder %s241, %s242
      %p254 = scmp.eq.s32.totalorder %s33, 7
      %p255 = por %p253, %p254
      %p257 = scmp.ne.s32.totalorder %s242, %s256
      %p258 = scmp.eq.s32.totalorder %s33, 0
      %p259 = por %p257, %p258
      %s261 = sadd.s32 %s260, 1
      %p264 = scmp.eq.s32.totalorder %s27, 7
      %p265 = scmp.ne.s32.totalorder %s260, %s262
      %p266 = scmp.eq.s32.totalorder %s27, 0
      %p267 = por %p265, %p266
      %p268 = scmp.ne.s32.totalorder %s260, %s262
      %p269 = scmp.eq.s32.totalorder %s32, 7
      %p270 = por %p268, %p269
      %p271 = scmp.ne.s32.totalorder %s262, %s263
      %p272 = scmp.eq.s32.totalorder %s32, 0
      %p273 = por %p271, %p272
      %p274 = scmp.ne.s32.totalorder %s262, %s263
      %p275 = scmp.eq.s32.totalorder %s33, 7
      %p276 = por %p274, %p275
      %p278 = scmp.ne.s32.totalorder %s263, %s277
      %p279 = scmp.eq.s32.totalorder %s33, 0
      %p280 = por %p278, %p279
      %s282 = sadd.s32 %s281, 1
      %p285 = scmp.eq.s32.totalorder %s27, 7
      %p286 = scmp.ne.s32.totalorder %s281, %s283
      %p287 = scmp.eq.s32.totalorder %s27, 0
      %p288 = por %p286, %p287
      %p289 = scmp.ne.s32.totalorder %s281, %s283
      %p290 = scmp.eq.s32.totalorder %s32, 7
      %p291 = por %p289, %p290
      %p292 = scmp.ne.s32.totalorder %s283, %s284
      %p293 = scmp.eq.s32.totalorder %s32, 0
      %p294 = por %p292, %p293
      %p295 = scmp.ne.s32.totalorder %s283, %s284
      %p296 = scmp.eq.s32.totalorder %s33, 7
      %p297 = por %p295, %p296
      %p299 = scmp.ne.s32.totalorder %s284, %s298
      %p300 = scmp.eq.s32.totalorder %s33, 0
      %p301 = por %p299, %p300
      %s302 = ssub.s32 %s35, %s49
      %p303 = scmp.eq.s32.totalorder %s302, 0
      %s305 = sadd.s32 %s304, 1
      %s306 = scalar_select %p303, %s304, %s305
      %p309 = pneg %p303
      %p310 = scmp.eq.s32.totalorder %s27, 7
      %p311 = por %p309, %p310
      %p312 = scmp.ne.s32.totalorder %s304, %s307
      %p313 = scmp.eq.s32.totalorder %s27, 0
      %p314 = por %p312, %p313
      %p315 = scmp.ne.s32.totalorder %s304, %s307
      %p316 = scmp.eq.s32.totalorder %s32, 7
      %p317 = por %p315, %p316
      %p318 = scmp.ne.s32.totalorder %s307, %s308
      %p319 = scmp.eq.s32.totalorder %s32, 0
      %p320 = por %p318, %p319
      %p321 = scmp.ne.s32.totalorder %s307, %s308
      %p322 = scmp.eq.s32.totalorder %s33, 7
      %p323 = por %p321, %p322
      %p325 = scmp.ne.s32.totalorder %s308, %s324
      %p326 = scmp.eq.s32.totalorder %s33, 0
      %p327 = por %p325, %p326
      %s328 = ssub.s32 %s35, %s49
      %p329 = scmp.eq.s32.totalorder %s328, 0
      %s331 = sadd.s32 %s330, 1
      %s332 = scalar_select %p329, %s330, %s331
      %p335 = pneg %p329
      %p336 = scmp.eq.s32.totalorder %s27, 7
      %p337 = por %p335, %p336
      %p338 = scmp.ne.s32.totalorder %s330, %s333
      %p339 = scmp.eq.s32.totalorder %s27, 0
      %p340 = por %p338, %p339
      %p341 = scmp.ne.s32.totalorder %s330, %s333
      %p342 = scmp.eq.s32.totalorder %s32, 7
      %p343 = por %p341, %p342
      %p344 = scmp.ne.s32.totalorder %s333, %s334
      %p345 = scmp.eq.s32.totalorder %s32, 0
      %p346 = por %p344, %p345
      %p347 = scmp.ne.s32.totalorder %s333, %s334
      %p348 = scmp.eq.s32.totalorder %s33, 7
      %p349 = por %p347, %p348
      %p351 = scmp.ne.s32.totalorder %s334, %s350
      %p352 = scmp.eq.s32.totalorder %s33, 0
      %p353 = por %p351, %p352
      %s354 = ssub.s32 %s34, %s53
      %s355 = ssub.s32 %s35, %s49
      %s356 = sor.u32 %s354, %s355
      %p357 = scmp.eq.s32.totalorder %s356, 0
      %s359 = sadd.s32 %s358, 1
      %s360 = scalar_select %p357, %s358, %s359
      %p363 = pneg %p357
      %p364 = scmp.eq.s32.totalorder %s27, 7
      %p365 = por %p363, %p364
      %p366 = scmp.ne.s32.totalorder %s358, %s361
      %p367 = scmp.eq.s32.totalorder %s27, 0
      %p368 = por %p366, %p367
      %p369 = scmp.ne.s32.totalorder %s358, %s361
      %p370 = scmp.eq.s32.totalorder %s32, 7
      %p371 = por %p369, %p370
      %p372 = scmp.ne.s32.totalorder %s361, %s362
      %p373 = scmp.eq.s32.totalorder %s32, 0
      %p374 = por %p372, %p373
      %p375 = scmp.ne.s32.totalorder %s361, %s362
      %p376 = scmp.eq.s32.totalorder %s33, 7
      %p377 = por %p375, %p376
      %p379 = scmp.ne.s32.totalorder %s362, %s378
      %p380 = scmp.eq.s32.totalorder %s33, 0
      %p381 = por %p379, %p380
      %s382 = ssub.s32 %s34, %s53
      %s383 = ssub.s32 %s36, %s45
      %s384 = sor.u32 %s382, %s383
      %s385 = ssub.s32 %s35, %s49
      %s386 = sor.u32 %s384, %s385
      %p387 = scmp.eq.s32.totalorder %s386, 0
      %s389 = sadd.s32 %s388, 1
      %s390 = scalar_select %p387, %s388, %s389
      %p393 = pneg %p387
      %p394 = scmp.eq.s32.totalorder %s27, 7
      %p395 = por %p393, %p394
      %p396 = scmp.ne.s32.totalorder %s388, %s391
      %p397 = scmp.eq.s32.totalorder %s27, 0
      %p398 = por %p396, %p397
      %p399 = scmp.ne.s32.totalorder %s388, %s391
      %p400 = scmp.eq.s32.totalorder %s32, 7
      %p401 = por %p399, %p400
      %p402 = scmp.ne.s32.totalorder %s391, %s392
      %p403 = scmp.eq.s32.totalorder %s32, 0
      %p404 = por %p402, %p403
      %p405 = scmp.ne.s32.totalorder %s391, %s392
      %p406 = scmp.eq.s32.totalorder %s33, 7
      %p407 = por %p405, %p406
      %p409 = scmp.ne.s32.totalorder %s392, %s408
      %p410 = scmp.eq.s32.totalorder %s33, 0
      %p411 = por %p409, %p410
      %p412 = scmp.le.s32.totalorder 1, %s27
      %p413 = scmp.lt.s32.totalorder %s27, 9
      %p414 = pnand %p412, %p413
      %p415 = pneg %p414
      // Predicated region
      $region9: #{tpu_custom_call.1} parent=5 // pred_check
        _
      $region10: #{tpu_custom_call.1} parent=5 // pred_check_branch
        %417 = sbr.rel (%p414) target = $region12
      $region11: #{tpu_custom_call.1} parent=5 // pred_region
        %s418 = ssub.s32 %s27, 1
        // Predicated region
        $region13: #{tpu_custom_call.1} parent=11 // pred_check
          %p419 = pneg %p147
        $region14: #{tpu_custom_call.1} parent=11 // pred_check_branch
          %421 = sbr.rel (%p419) target = $region16
        $region15: #{tpu_custom_call.1} parent=11 // pred_region
          _
        $region16: #{tpu_custom_call.1} parent=11 // pred_fallthru
          _
        // Predicated region
        $region17: #{tpu_custom_call.1} parent=11 // pred_check
          %p422 = pneg %p168
        $region18: #{tpu_custom_call.1} parent=11 // pred_check_branch
          %424 = sbr.rel (%p422) target = $region20
        $region19: #{tpu_custom_call.1} parent=11 // pred_region
          _
        $region20: #{tpu_custom_call.1} parent=11 // pred_fallthru
          _
        // Predicated region
        $region21: #{tpu_custom_call.1} parent=11 // pred_check
          %p425 = pneg %p189
        $region22: #{tpu_custom_call.1} parent=11 // pred_check_branch
          %427 = sbr.rel (%p425) target = $region24
        $region23: #{tpu_custom_call.1} parent=11 // pred_region
          _
        $region24: #{tpu_custom_call.1} parent=11 // pred_fallthru
          _
        // Predicated region
        $region25: #{tpu_custom_call.1} parent=11 // pred_check
          %p428 = pneg %p210
        $region26: #{tpu_custom_call.1} parent=11 // pred_check_branch
          %430 = sbr.rel (%p428) target = $region28
        $region27: #{tpu_custom_call.1} parent=11 // pred_region
          _
        $region28: #{tpu_custom_call.1} parent=11 // pred_fallthru
          _
        // Predicated region
        $region29: #{tpu_custom_call.1} parent=11 // pred_check
          %p431 = pneg %p231
        $region30: #{tpu_custom_call.1} parent=11 // pred_check_branch
          %433 = sbr.rel (%p431) target = $region32
        $region31: #{tpu_custom_call.1} parent=11 // pred_region
          _
        $region32: #{tpu_custom_call.1} parent=11 // pred_fallthru
          _
        // Predicated region
        $region33: #{tpu_custom_call.1} parent=11 // pred_check
          %p434 = pneg %p252
        $region34: #{tpu_custom_call.1} parent=11 // pred_check_branch
          %436 = sbr.rel (%p434) target = $region36
        $region35: #{tpu_custom_call.1} parent=11 // pred_region
          _
        $region36: #{tpu_custom_call.1} parent=11 // pred_fallthru
          _
        // Predicated region
        $region37: #{tpu_custom_call.1} parent=11 // pred_check
          %p437 = pneg %p273
        $region38: #{tpu_custom_call.1} parent=11 // pred_check_branch
          %439 = sbr.rel (%p437) target = $region40
        $region39: #{tpu_custom_call.1} parent=11 // pred_region
          _
        $region40: #{tpu_custom_call.1} parent=11 // pred_fallthru
          _
        // Predicated region
        $region41: #{tpu_custom_call.1} parent=11 // pred_check
          %p440 = pneg %p294
        $region42: #{tpu_custom_call.1} parent=11 // pred_check_branch
          %442 = sbr.rel (%p440) target = $region44
        $region43: #{tpu_custom_call.1} parent=11 // pred_region
          _
        $region44: #{tpu_custom_call.1} parent=11 // pred_fallthru
          _
        // Predicated region
        $region45: #{tpu_custom_call.1} parent=11 // pred_check
          %p443 = pneg %p320
        $region46: #{tpu_custom_call.1} parent=11 // pred_check_branch
          %445 = sbr.rel (%p443) target = $region48
        $region47: #{tpu_custom_call.1} parent=11 // pred_region
          %p446 = scmp.lt.s32.totalorder %s38, 0
          %s447 = scalar_select %p446, %s38, 0
          %s448 = smul.addr %s447, 4
          %s449 = scalar_lea.vmem %s11, %s448
        $region48: #{tpu_custom_call.1} parent=11 // pred_fallthru
          _
        // Predicated region
        $region49: #{tpu_custom_call.1} parent=11 // pred_check
          %p450 = pneg %p346
        $region50: #{tpu_custom_call.1} parent=11 // pred_check_branch
          %452 = sbr.rel (%p450) target = $region52
        $region51: #{tpu_custom_call.1} parent=11 // pred_region
          %p453 = scmp.lt.s32.totalorder %s38, 0
          %s454 = scalar_select %p453, %s38, 0
          %s455 = smul.addr %s454, 8
          %s456 = scalar_lea.vmem %s12, %s455
        $region52: #{tpu_custom_call.1} parent=11 // pred_fallthru
          _
      $region12: #{tpu_custom_call.1} parent=5 // pred_fallthru
        _
      %p457 = scmp.lt.s32.totalorder %s27, 8
      // Predicated region
      $region53: #{tpu_custom_call.1} parent=5 // pred_check
        %p458 = pneg %p457
      $region54: #{tpu_custom_call.1} parent=5 // pred_check_branch
        %460 = sbr.rel (%p458) target = $region56
      $region55: #{tpu_custom_call.1} parent=5 // pred_region
        // Predicated region
        $region57: #{tpu_custom_call.1} parent=55 // pred_check
          %p461 = pneg %p68
        $region58: #{tpu_custom_call.1} parent=55 // pred_check_branch
          %463 = sbr.rel (%p461) target = $region60
        $region59: #{tpu_custom_call.1} parent=55 // pred_region
          %p464 = scmp.lt.s32.totalorder %s34, 1
          %s465 = scalar_select %p464, %s34, 1
          %p466 = scmp.lt.s32.totalorder %s35, 0
          %s467 = scalar_select %p466, %s35, 0
          %s468 = sadd.s32 %s467, %s465
          %s469 = smul.addr %s468, 4
          %s470 = scalar_lea.vmem %s0, %s469
        $region60: #{tpu_custom_call.1} parent=55 // pred_fallthru
          _
        // Predicated region
        $region61: #{tpu_custom_call.1} parent=55 // pred_check
          %p471 = pneg %p94
        $region62: #{tpu_custom_call.1} parent=55 // pred_check_branch
          %473 = sbr.rel (%p471) target = $region64
        $region63: #{tpu_custom_call.1} parent=55 // pred_region
          %p474 = scmp.lt.s32.totalorder %s34, 1
          %s475 = scalar_select %p474, %s34, 1
          %s476 = smul.addr %s475, 4
          %s477 = smul.addr %s476, 4
          %s478 = scalar_lea.vmem %s1, %s477
        $region64: #{tpu_custom_call.1} parent=55 // pred_fallthru
          _
        // Predicated region
        $region65: #{tpu_custom_call.1} parent=55 // pred_check
          %p479 = pneg %p120
        $region66: #{tpu_custom_call.1} parent=55 // pred_check_branch
          %481 = sbr.rel (%p479) target = $region68
        $region67: #{tpu_custom_call.1} parent=55 // pred_region
          %p482 = scmp.lt.s32.totalorder %s34, 1
          %s483 = scalar_select %p482, %s34, 1
          %s484 = smul.addr %s483, 4
          %s485 = scalar_lea.vmem %s2, %s484
        $region68: #{tpu_custom_call.1} parent=55 // pred_fallthru
          _
      $region56: #{tpu_custom_call.1} parent=5 // pred_fallthru
        _
      %p486 = scmp.le.s32.totalorder 1, %s27
      %p487 = scmp.lt.s32.totalorder %s27, 9
      %p488 = pnand %p486, %p487
      %p489 = pneg %p488
      // Predicated region
      $region69: #{tpu_custom_call.1} parent=5 // pred_check
        _
      $region70: #{tpu_custom_call.1} parent=5 // pred_check_branch
        %491 = sbr.rel (%p488) target = $region72
      $region71: #{tpu_custom_call.1} parent=5 // pred_region
        %s492 = ssub.s32 %s27, 1
        %p493 = scmp.lt.s32.totalorder %s37, 1
        %s494 = scalar_select %p493, %s37, 1
        %p495 = scmp.lt.s32.totalorder %s38, 0
        %s496 = scalar_select %p495, %s38, 0
        %s497 = sadd.s32 %s496, %s494
        %s498 = smul.addr %s497, 4
        %s499 = scalar_lea.vmem %s0, %s498
        %p500 = pneg %p74
        %p501 = pneg %p71
        %p502 = scmp.lt.s32.totalorder %s37, 1
        %s503 = scalar_select %p502, %s37, 1
        %s504 = smul.addr %s503, 4
        %s505 = smul.addr %s504, 4
        %s506 = scalar_lea.vmem %s1, %s505
        %p507 = pneg %p100
        %p508 = pneg %p97
        %p509 = scmp.lt.s32.totalorder %s37, 1
        %s510 = scalar_select %p509, %s37, 1
        %s511 = smul.addr %s510, 4
        %s512 = scalar_lea.vmem %s2, %s511
        %p513 = pneg %p126
        %p514 = pneg %p123
        %p515 = pneg %p147
        %p516 = pneg %p144
        %p517 = pneg %p168
        %p518 = pneg %p165
        %p519 = pneg %p189
        %p520 = pneg %p186
        %p521 = pneg %p210
        %p522 = pneg %p207
        %p523 = pneg %p231
        %p524 = pneg %p228
        %p525 = pneg %p252
        %p526 = pneg %p249
        %p527 = pneg %p273
        %p528 = pneg %p270
        %p529 = pneg %p294
        %p530 = pneg %p291
        %p531 = scmp.lt.s32.totalorder %s38, 0
        %s532 = scalar_select %p531, %s38, 0
        %s533 = smul.addr %s532, 4
        %s534 = scalar_lea.vmem %s11, %s533
        %p535 = pneg %p320
        %p536 = pneg %p317
        %p537 = scmp.lt.s32.totalorder %s38, 0
        %s538 = scalar_select %p537, %s38, 0
        %s539 = smul.addr %s538, 8
        %s540 = scalar_lea.vmem %s12, %s539
        %p541 = pneg %p346
        %p542 = pneg %p343
        %p543 = pneg %p374
        %p544 = pneg %p371
        %s545 = sand.u32 %s361, 1
        %s546 = scalar_lea.sflag [#allocation5], %s545
        %s547 = sand.u32 %s361, 1
        %s548 = smul.addr %s547, 8
        %s549 = scalar_lea.vmem [#allocation4], %s548
        %p550 = pneg %p404
        %p551 = pneg %p401
        %s552 = sand.u32 %s391, 1
        %s553 = scalar_lea.sflag [#allocation7], %s552
        %s554 = sand.u32 %s391, 1
        %s555 = smul.addr %s554, 4
        %s556 = scalar_lea.vmem [#allocation6], %s555
        %p557 = scmp.lt.s32.totalorder %s37, 1
        %s558 = scalar_select %p557, %s37, 1
        %p559 = scmp.lt.s32.totalorder %s38, 0
        %s560 = scalar_select %p559, %s38, 0
        %s561 = sadd.s32 %s560, %s558
        %s562 = smul.addr %s561, 4
        %s563 = scalar_lea.vmem %s0, %s562
        %p564 = scmp.lt.s32.totalorder %s37, 1
        %s565 = scalar_select %p564, %s37, 1
        %s566 = smul.addr %s565, 4
        %s567 = smul.addr %s566, 4
        %s568 = scalar_lea.vmem %s1, %s567
        %p569 = scmp.lt.s32.totalorder %s37, 1
        %s570 = scalar_select %p569, %s37, 1
        %s571 = smul.addr %s570, 4
        %s572 = scalar_lea.vmem %s2, %s571
        %p573 = scmp.lt.s32.totalorder %s38, 0
        %s574 = scalar_select %p573, %s38, 0
        %s575 = smul.addr %s574, 4
        %s576 = scalar_lea.vmem %s11, %s575
        %p577 = scmp.lt.s32.totalorder %s38, 0
        %s578 = scalar_select %p577, %s38, 0
        %s579 = smul.addr %s578, 8
        %s580 = scalar_lea.vmem %s12, %s579
        %p582 = scmp.eq.s32.totalorder %s39, 0
        %p583 = scmp.eq.s32.totalorder %s38, 0
        %p584 = pnand %p582, %p583
        %p585 = pneg %p584
        // Predicated region
        $region73: #{tpu_custom_call.1} parent=71 // pred_check
          _
        $region74: #{tpu_custom_call.1} parent=71 // pred_check_branch
          %587 = sbr.rel (%p584) target = $region76
        $region75: #{tpu_custom_call.1} parent=71 // pred_region
          %v588 = vld [vmem:[%s5] sm:$0xf]
          %v589 = vld [vmem:[%s5 + $0x4] sm:$0xf]
          %v590 = vld [vmem:[%s5 + $0x8] sm:$0xf]
          %v591 = vld [vmem:[%s5 + $0xc] sm:$0xf]
          %v592 = vld [vmem:[%s568] sm:$0xf]
          %v593 = vld [vmem:[%s568 + $0x4] sm:$0xf]
          %v594 = vld [vmem:[%s568 + $0x8] sm:$0xf]
          %v595 = vld [vmem:[%s568 + $0xc] sm:$0xf]
          %v596 = vld [vmem:[%s6] sm:$0xff]
          %v597 = vld [vmem:[%s6 + $0x8] sm:$0xff]
          %v598 = vld [vmem:[%s6 + $0x10] sm:$0xff]
          %v599 = vld [vmem:[%s6 + $0x18] sm:$0xff]
          %601 = vset.pattern.permute.xlu0 0
          %602 = vperm.xlu0 %601, %v596
          %v603 = vpop.permute.xlu0 %602
          %606 = vset.pattern.permute.xlu0 0
          %607 = vperm.xlu0 %606, %v597
          %v608 = vpop.permute.xlu0 %607
          %611 = vset.pattern.permute.xlu0 0
          %612 = vperm.xlu0 %611, %v598
          %v613 = vpop.permute.xlu0 %612
          %616 = vset.pattern.permute.xlu0 0
          %617 = vperm.xlu0 %616, %v599
          %v618 = vpop.permute.xlu0 %617
          %v624 = vunpack.c.l.b16 %v588
          %v625 = vunpack.c.l.b16 %v589
          %v626 = vunpack.c.l.b16 %v590
          %v627 = vunpack.c.l.b16 %v591
          %v628 = vpack.c.b16 %v625, %v624
          %v629 = vpack.c.b16 %v627, %v626
          %v634 = vunpack.c.l.b16 %v592
          %v635 = vunpack.c.l.b16 %v593
          %v636 = vunpack.c.l.b16 %v594
          %v637 = vunpack.c.l.b16 %v595
          %v638 = vpack.c.b16 %v635, %v634
          %v639 = vpack.c.b16 %v637, %v636
          %vm642 = vcmask 261120
          %v644 = vsel %vm642, %v628, 0
          %v647 = vsel %vm642, %v629, 0
          %649 = vmatprep.subr.bf16.mxu0 0
          %650 = vmatpush1.bf16.msra.mxu0 0
          %651 = vmatprep.subr.bf16.mxu0 0
          %652 = vmatpush1.bf16.msra.mxu0 0
          %653 = vmatprep.subr.bf16.mxu0 0
          %654 = vmatpush1.bf16.msra.mxu0 0
          %655 = vmatprep.subr.bf16.mxu0 0
          %656 = vmatpush1.bf16.msra.mxu0 0
          %657 = vmatprep.subr.bf16.mxu0 0
          %658 = vmatpush1.bf16.msra.mxu0 0
          %659 = vmatprep.subr.bf16.mxu0 0
          %660 = vmatpush1.bf16.msra.mxu0 0
          %661 = vmatprep.subr.bf16.mxu0 0
          %662 = vmatpush1.bf16.msra.mxu0 %v639
          %663 = vmatprep.subr.bf16.mxu0 0
          %664 = vmatpush1.bf16.msra.mxu0 %v638
          %665 = vmatprep.subr.bf16.mxu0 0
          %666 = vmatpush2.bf16.msra.mxu0 0
          %667 = vmatprep.subr.bf16.mxu0 0
          %668 = vmatpush2.bf16.msra.mxu0 0
          %669 = vmatprep.subr.bf16.mxu0 0
          %670 = vmatpush2.bf16.msra.mxu0 0
          %671 = vmatprep.subr.bf16.mxu0 0
          %672 = vmatpush2.bf16.msra.mxu0 0
          %673 = vmatprep.subr.bf16.mxu0 0
          %674 = vmatpush2.bf16.msra.mxu0 0
          %675 = vmatprep.subr.bf16.mxu0 0
          %676 = vmatpush2.bf16.msra.mxu0 0
          %677 = vmatprep.subr.bf16.mxu0 0
          %678 = vmatpush2.bf16.msra.mxu0 0
          %679 = vmatprep.subr.bf16.mxu0 0
          %680 = vmatpush2.bf16.msra.mxu0 0
          %681 = vmatprep.mubr.bf16.mxu0 0
          %682 = vmatmul.mubr.bf16.gmra.mxu0 %v644
          %v683 = vpop.f32.mrf.mxu0
          %v684 = vadd.f32 %v603, %v683
          %v685 = vpop.f32.mrf.mxu0
          %v686 = vpop.f32.mrf.mxu0
          %v687 = vadd.f32 %v608, %v686
          %v688 = vpop.f32.mrf.mxu0
          %689 = vmatprep.mubr.bf16.mxu0 0
          %690 = vmatmul.mubr.bf16.gmra.mxu0 %v647
          %v691 = vpop.f32.mrf.mxu0
          %v692 = vadd.f32 %v613, %v691
          %v693 = vpop.f32.mrf.mxu0
          %v694 = vpop.f32.mrf.mxu0
          %v695 = vadd.f32 %v618, %v694
          %v696 = vpop.f32.mrf.mxu0
          %697 = vdwg.mxu0
          %vm698 = vcmask 64512
          %699 = vst.msk [vmem:[#allocation2] sm:$0xff] %vm698, %v684
          %700 = vst.msk [vmem:[#allocation2 + $0x8] sm:$0xff] %vm698, %v687
          %701 = vst.msk [vmem:[#allocation2 + $0x10] sm:$0xff] %vm698, %v692
          %702 = vst.msk [vmem:[#allocation2 + $0x18] sm:$0xff] %vm698, %v695
          %v703 = vld [vmem:[%s572] sm:$0xf]
          %v704 = vld [vmem:[%s7] sm:$0xf]
          %v705 = vld [vmem:[%s7 + $0x4] sm:$0xf]
          %v706 = vld [vmem:[%s7 + $0x8] sm:$0xf]
          %v707 = vld [vmem:[%s7 + $0xc] sm:$0xf]
          %v708 = vld [vmem:[%s8] sm:$0x1]
          %v710 = vlaneseq
          %v711 = vshrl.u32 %v710, 7
          %v712 = vsub.s32 0, %v711
          %v713 = vrot.slane %v708, %v712
          %v719 = vunpack.c.l.b16 %v704
          %v720 = vunpack.c.l.b16 %v705
          %v721 = vunpack.c.l.b16 %v706
          %v722 = vunpack.c.l.b16 %v707
          %v723 = vpack.c.b16 %v720, %v719
          %v724 = vpack.c.b16 %v722, %v721
          %v728 = vsel %vm642, %v703, 0
          %730 = vmatprep.subr.bf16.mxu0 0
          %731 = vmatpush1.bf16.msra.mxu0 0
          %732 = vmatprep.subr.bf16.mxu0 0
          %733 = vmatpush1.bf16.msra.mxu0 0
          %734 = vmatprep.subr.bf16.mxu0 0
          %735 = vmatpush1.bf16.msra.mxu0 0
          %736 = vmatprep.subr.bf16.mxu0 0
          %737 = vmatpush1.bf16.msra.mxu0 0
          %738 = vmatprep.subr.bf16.mxu0 0
          %739 = vmatpush1.bf16.msra.mxu0 0
          %740 = vmatprep.subr.bf16.mxu0 0
          %741 = vmatpush1.bf16.msra.mxu0 0
          %742 = vmatprep.subr.bf16.mxu0 0
          %743 = vmatpush1.bf16.msra.mxu0 %v724
          %744 = vmatprep.subr.bf16.mxu0 0
          %745 = vmatpush1.bf16.msra.mxu0 %v723
          %746 = vmatprep.subr.bf16.mxu0 0
          %747 = vmatpush2.bf16.msra.mxu0 0
          %748 = vmatprep.subr.bf16.mxu0 0
          %749 = vmatpush2.bf16.msra.mxu0 0
          %750 = vmatprep.subr.bf16.mxu0 0
          %751 = vmatpush2.bf16.msra.mxu0 0
          %752 = vmatprep.subr.bf16.mxu0 0
          %753 = vmatpush2.bf16.msra.mxu0 0
          %754 = vmatprep.subr.bf16.mxu0 0
          %755 = vmatpush2.bf16.msra.mxu0 0
          %756 = vmatprep.subr.bf16.mxu0 0
          %757 = vmatpush2.bf16.msra.mxu0 0
          %758 = vmatprep.subr.bf16.mxu0 0
          %759 = vmatpush2.bf16.msra.mxu0 0
          %760 = vmatprep.subr.bf16.mxu0 0
          %761 = vmatpush2.bf16.msra.mxu0 0
          %762 = vmatprep.mubr.bf16.mxu0 0
          %763 = vmatmul.mubr.bf16.gmra.mxu0 %v728
          %v764 = vpop.f32.mrf.mxu0
          %v765 = vadd.f32 %v713, %v764
          %v766 = vpop.f32.mrf.mxu0
          %v767 = vpop.f32.mrf.mxu0
          %v768 = vpop.f32.mrf.mxu0
          %769 = vdwg.mxu0
          %v770 = vpack.c.bf16 %v765, %v765
          %vm771 = vcmask 257024
          %772 = vst.msk [vmem:[#allocation3] sm:$0xf] %vm771, %v770
        $region76: #{tpu_custom_call.1} parent=71 // pred_fallthru
          _
        // Predicated region
        $region77: #{tpu_custom_call.1} parent=71 // pred_check
          %p773 = pneg %p582
        $region78: #{tpu_custom_call.1} parent=71 // pred_check_branch
          %775 = sbr.rel (%p773) target = $region80
        $region79: #{tpu_custom_call.1} parent=71 // pred_region
          %v776 = vld [vmem:[%s10] sm:$0x1]
          %v778 = vlaneseq
          %v779 = vshrl.u32 %v778, 7
          %v780 = vsub.s32 0, %v779
          %v781 = vrot.slane %v776, %v780
          %vm783 = vcmask 261120
          %784 = vst.msk [vmem:[%s549] sm:$0xff] %vm783, %v781
        $region80: #{tpu_custom_call.1} parent=71 // pred_fallthru
          _
        %v785 = vld [vmem:[%s563] sm:$0xf]
        %s786 = smul.u32 %s39, 4
        %s787 = smul.addr %s786, 4
        %s788 = scalar_lea.vmem %s3, %s787
        %v789 = vld [vmem:[%s788] sm:$0xf]
        %v790 = vld [vmem:[%s788 + $0x4] sm:$0xf]
        %v791 = vld [vmem:[%s788 + $0x8] sm:$0xf]
        %v792 = vld [vmem:[%s788 + $0xc] sm:$0xf]
        %s793 = scalar_lea.vmem %s4, %s39
        %v794 = vld [vmem:[%s793] sm:$0x1]
        %v796 = vlaneseq
        %v797 = vshrl.u32 %v796, 7
        %v798 = vsub.s32 0, %v797
        %v799 = vrot.slane %v794, %v798
        %v805 = vunpack.c.l.b16 %v789
        %v806 = vunpack.c.l.b16 %v790
        %v807 = vunpack.c.l.b16 %v791
        %v808 = vunpack.c.l.b16 %v792
        %v809 = vpack.c.b16 %v806, %v805
        %v810 = vpack.c.b16 %v808, %v807
        %vm813 = vcmask 261120
        %v815 = vsel %vm813, %v785, 0
        %817 = vmatprep.subr.bf16.mxu0 0
        %818 = vmatpush1.bf16.msra.mxu0 0
        %819 = vmatprep.subr.bf16.mxu0 0
        %820 = vmatpush1.bf16.msra.mxu0 0
        %821 = vmatprep.subr.bf16.mxu0 0
        %822 = vmatpush1.bf16.msra.mxu0 0
        %823 = vmatprep.subr.bf16.mxu0 0
        %824 = vmatpush1.bf16.msra.mxu0 0
        %825 = vmatprep.subr.bf16.mxu0 0
        %826 = vmatpush1.bf16.msra.mxu0 0
        %827 = vmatprep.subr.bf16.mxu0 0
        %828 = vmatpush1.bf16.msra.mxu0 0
        %829 = vmatprep.subr.bf16.mxu0 0
        %830 = vmatpush1.bf16.msra.mxu0 %v810
        %831 = vmatprep.subr.bf16.mxu0 0
        %832 = vmatpush1.bf16.msra.mxu0 %v809
        %833 = vmatprep.subr.bf16.mxu0 0
        %834 = vmatpush2.bf16.msra.mxu0 0
        %835 = vmatprep.subr.bf16.mxu0 0
        %836 = vmatpush2.bf16.msra.mxu0 0
        %837 = vmatprep.subr.bf16.mxu0 0
        %838 = vmatpush2.bf16.msra.mxu0 0
        %839 = vmatprep.subr.bf16.mxu0 0
        %840 = vmatpush2.bf16.msra.mxu0 0
        %841 = vmatprep.subr.bf16.mxu0 0
        %842 = vmatpush2.bf16.msra.mxu0 0
        %843 = vmatprep.subr.bf16.mxu0 0
        %844 = vmatpush2.bf16.msra.mxu0 0
        %845 = vmatprep.subr.bf16.mxu0 0
        %846 = vmatpush2.bf16.msra.mxu0 0
        %847 = vmatprep.subr.bf16.mxu0 0
        %848 = vmatpush2.bf16.msra.mxu0 0
        %849 = vmatprep.mubr.bf16.mxu0 0
        %850 = vmatmul.mubr.bf16.gmra.mxu0 %v815
        %v851 = vpop.f32.mrf.mxu0
        %v852 = vadd.f32 %v799, %v851
        %v853 = vpop.f32.mrf.mxu0
        %v854 = vpop.f32.mrf.mxu0
        %v855 = vpop.f32.mrf.mxu0
        %856 = vdwg.mxu0
        %v857 = vpack.c.bf16 %v852, %v852
        %v858 = vld [vmem:[%s576] sm:$0xf]
        %vm859 = vcmask 64512
        %v861 = vsel %vm859, %v857, 0
        %vm863 = vcmask 1043456
        %v865 = vsel %vm863, %v858, 0
        %867 = vmatprep.subr.bf16.mxu0 0
        %868 = vmatpush1.bf16.msra.mxu0 0
        %869 = vmatprep.subr.bf16.mxu0 0
        %870 = vmatpush1.bf16.msra.mxu0 0
        %871 = vmatprep.subr.bf16.mxu0 0
        %872 = vmatpush1.bf16.msra.mxu0 0
        %873 = vmatprep.subr.bf16.mxu0 0
        %874 = vmatpush1.bf16.msra.mxu0 0
        %875 = vmatprep.subr.bf16.mxu0 0
        %876 = vmatpush1.bf16.msra.mxu0 0
        %877 = vmatprep.subr.bf16.mxu0 0
        %878 = vmatpush1.bf16.msra.mxu0 0
        %879 = vmatprep.subr.bf16.mxu0 0
        %880 = vmatpush1.bf16.msra.mxu0 0
        %881 = vmatprep.subr.bf16.mxu0 0
        %882 = vmatpush1.bf16.msra.mxu0 %v865
        %883 = vmatprep.subr.bf16.mxu0 0
        %884 = vmatpush2.bf16.msra.mxu0 0
        %885 = vmatprep.subr.bf16.mxu0 0
        %886 = vmatpush2.bf16.msra.mxu0 0
        %887 = vmatprep.subr.bf16.mxu0 0
        %888 = vmatpush2.bf16.msra.mxu0 0
        %889 = vmatprep.subr.bf16.mxu0 0
        %890 = vmatpush2.bf16.msra.mxu0 0
        %891 = vmatprep.subr.bf16.mxu0 0
        %892 = vmatpush2.bf16.msra.mxu0 0
        %893 = vmatprep.subr.bf16.mxu0 0
        %894 = vmatpush2.bf16.msra.mxu0 0
        %895 = vmatprep.subr.bf16.mxu0 0
        %896 = vmatpush2.bf16.msra.mxu0 0
        %897 = vmatprep.subr.bf16.mxu0 0
        %898 = vmatpush2.bf16.msra.mxu0 0
        %899 = vmatprep.mubr.bf16.mxu0 0
        %900 = vmatmul.mubr.bf16.gmra.mxu0 %v861
        %v901 = vpop.f32.mrf.mxu0
        %v902 = vadd.f32 0.0, %v901
        %v903 = vpop.f32.mrf.mxu0
        %v904 = vpop.f32.mrf.mxu0
        %v905 = vpop.f32.mrf.mxu0
        %906 = vdwg.mxu0
        %v907 = vld [vmem:[%s580] sm:$0xff]
        %v908 = vmul.f32 %v902, %v907
        %s910 = sor.u32 256, 121
        %911 = vrot.lane.b32.xlu0 %v908, %s910
        %v912 = vpop.permute.xlu0 %911
        %s913 = smul.u32 %s39, 8
        %s914 = scalar_lea.vmem [#allocation2], %s913
        %v915 = vld [vmem:[%s914] sm:$0xff]
        %v916 = vpack.c.bf16 %v915, %v915
        %v918 = vsel %vm863, %v916, 0
        %920 = vmatprep.subr.bf16.mxu0 0
        %921 = vmatpush1.bf16.msra.mxu0 0
        %922 = vmatprep.subr.bf16.mxu0 0
        %923 = vmatpush1.bf16.msra.mxu0 0
        %924 = vmatprep.subr.bf16.mxu0 0
        %925 = vmatpush1.bf16.msra.mxu0 0
        %926 = vmatprep.subr.bf16.mxu0 0
        %927 = vmatpush1.bf16.msra.mxu0 0
        %928 = vmatprep.subr.bf16.mxu0 0
        %929 = vmatpush1.bf16.msra.mxu0 0
        %930 = vmatprep.subr.bf16.mxu0 0
        %931 = vmatpush1.bf16.msra.mxu0 0
        %932 = vmatprep.subr.bf16.mxu0 0
        %933 = vmatpush1.bf16.msra.mxu0 0
        %934 = vmatprep.subr.bf16.mxu0 0
        %935 = vmatpush1.bf16.msra.mxu0 %v918
        %936 = vmatprep.subr.bf16.mxu0 0
        %937 = vmatpush2.bf16.msra.mxu0 0
        %938 = vmatprep.subr.bf16.mxu0 0
        %939 = vmatpush2.bf16.msra.mxu0 0
        %940 = vmatprep.subr.bf16.mxu0 0
        %941 = vmatpush2.bf16.msra.mxu0 0
        %942 = vmatprep.subr.bf16.mxu0 0
        %943 = vmatpush2.bf16.msra.mxu0 0
        %944 = vmatprep.subr.bf16.mxu0 0
        %945 = vmatpush2.bf16.msra.mxu0 0
        %946 = vmatprep.subr.bf16.mxu0 0
        %947 = vmatpush2.bf16.msra.mxu0 0
        %948 = vmatprep.subr.bf16.mxu0 0
        %949 = vmatpush2.bf16.msra.mxu0 0
        %950 = vmatprep.subr.bf16.mxu0 0
        %951 = vmatpush2.bf16.msra.mxu0 0
        %952 = vmatprep.mubr.bf16.mxu0 0
        %953 = vmatmul.mubr.bf16.gmra.mxu0 %v861
        %v954 = vpop.f32.mrf.mxu0
        %v955 = vadd.f32 %v912, %v954
        %v956 = vpop.f32.mrf.mxu0
        %v957 = vpop.f32.mrf.mxu0
        %v958 = vpop.f32.mrf.mxu0
        %959 = vdwg.mxu0
        %v960 = vsel %vm859, %v955, -inf
        %961 = vmax.xlane.f32.xlu0 %v960
        %v962 = vpop.xlane.xlu0 %961
        %v963 = vsub.f32 %v955, %v962
        %v964 = vmul.f32 %v963, 1.442695
        %v965 = vpow.pop %v964
        %v966 = vsel %vm859, %v965, 0.0
        %967 = vadd.xlane.f32.xlu0 %v966
        %v968 = vpop.xlane.xlu0 %967
        %v969 = vrcp.pop %v968
        %v970 = vmul.f32 %v965, %v969
        %v971 = vpack.c.bf16 %v970, %v970
        %vm972 = vcmask 60416
        %973 = vst.msk [vmem:[%s556] sm:$0xf] %vm972, %v971
        %v974 = vld [vmem:[#allocation3] sm:$0xf]
        %v976 = vsel %vm859, %v971, 0
        %v979 = vsel %vm863, %v974, 0
        %981 = vmatprep.subr.bf16.mxu0 0
        %982 = vmatpush1.bf16.msra.mxu0 0
        %983 = vmatprep.subr.bf16.mxu0 0
        %984 = vmatpush1.bf16.msra.mxu0 0
        %985 = vmatprep.subr.bf16.mxu0 0
        %986 = vmatpush1.bf16.msra.mxu0 0
        %987 = vmatprep.subr.bf16.mxu0 0
        %988 = vmatpush1.bf16.msra.mxu0 0
        %989 = vmatprep.subr.bf16.mxu0 0
        %990 = vmatpush1.bf16.msra.mxu0 0
        %991 = vmatprep.subr.bf16.mxu0 0
        %992 = vmatpush1.bf16.msra.mxu0 0
        %993 = vmatprep.subr.bf16.mxu0 0
        %994 = vmatpush1.bf16.msra.mxu0 0
        %995 = vmatprep.subr.bf16.mxu0 0
        %996 = vmatpush1.bf16.msra.mxu0 %v979
        %997 = vmatprep.subr.bf16.mxu0 0
        %998 = vmatpush2.bf16.msra.mxu0 0
        %999 = vmatprep.subr.bf16.mxu0 0
        %1000 = vmatpush2.bf16.msra.mxu0 0
        %1001 = vmatprep.subr.bf16.mxu0 0
        %1002 = vmatpush2.bf16.msra.mxu0 0
        %1003 = vmatprep.subr.bf16.mxu0 0
        %1004 = vmatpush2.bf16.msra.mxu0 0
        %1005 = vmatprep.subr.bf16.mxu0 0
        %1006 = vmatpush2.bf16.msra.mxu0 0
        %1007 = vmatprep.subr.bf16.mxu0 0
        %1008 = vmatpush2.bf16.msra.mxu0 0
        %1009 = vmatprep.subr.bf16.mxu0 0
        %1010 = vmatpush2.bf16.msra.mxu0 0
        %1011 = vmatprep.subr.bf16.mxu0 0
        %1012 = vmatpush2.bf16.msra.mxu0 0
        %1013 = vmatprep.mubr.bf16.mxu0 0
        %1014 = vmatmul.mubr.bf16.gmra.mxu0 %v976
        %v1015 = vpop.f32.mrf.mxu0
        %v1016 = vadd.f32 0.0, %v1015
        %v1017 = vpop.f32.mrf.mxu0
        %v1018 = vpop.f32.mrf.mxu0
        %v1019 = vpop.f32.mrf.mxu0
        %1020 = vdwg.mxu0
        %v1021 = vld [vmem:[%s549] sm:$0xff]
        %v1022 = vpack.c.bf16 %v1016, %v1016
        %s1023 = smul.addr %s786, 4
        %s1024 = scalar_lea.vmem %s9, %s1023
        %v1025 = vld [vmem:[%s1024] sm:$0xf]
        %v1026 = vld [vmem:[%s1024 + $0x4] sm:$0xf]
        %v1027 = vld [vmem:[%s1024 + $0x8] sm:$0xf]
        %v1028 = vld [vmem:[%s1024 + $0xc] sm:$0xf]
        %v1033 = vunpack.c.l.b16 %v1025
        %v1034 = vunpack.c.l.b16 %v1026
        %v1035 = vunpack.c.l.b16 %v1027
        %v1036 = vunpack.c.l.b16 %v1028
        %v1037 = vpack.c.b16 %v1034, %v1033
        %v1038 = vpack.c.b16 %v1036, %v1035
        %v1042 = vsel %vm813, %v1022, 0
        %1044 = vmatprep.subr.bf16.mxu0 0
        %1045 = vmatpush1.bf16.msra.mxu0 0
        %1046 = vmatprep.subr.bf16.mxu0 0
        %1047 = vmatpush1.bf16.msra.mxu0 0
        %1048 = vmatprep.subr.bf16.mxu0 0
        %1049 = vmatpush1.bf16.msra.mxu0 0
        %1050 = vmatprep.subr.bf16.mxu0 0
        %1051 = vmatpush1.bf16.msra.mxu0 0
        %1052 = vmatprep.subr.bf16.mxu0 0
        %1053 = vmatpush1.bf16.msra.mxu0 0
        %1054 = vmatprep.subr.bf16.mxu0 0
        %1055 = vmatpush1.bf16.msra.mxu0 0
        %1056 = vmatprep.subr.bf16.mxu0 0
        %1057 = vmatpush1.bf16.msra.mxu0 %v1038
        %1058 = vmatprep.subr.bf16.mxu0 0
        %1059 = vmatpush1.bf16.msra.mxu0 %v1037
        %1060 = vmatprep.subr.bf16.mxu0 0
        %1061 = vmatpush2.bf16.msra.mxu0 0
        %1062 = vmatprep.subr.bf16.mxu0 0
        %1063 = vmatpush2.bf16.msra.mxu0 0
        %1064 = vmatprep.subr.bf16.mxu0 0
        %1065 = vmatpush2.bf16.msra.mxu0 0
        %1066 = vmatprep.subr.bf16.mxu0 0
        %1067 = vmatpush2.bf16.msra.mxu0 0
        %1068 = vmatprep.subr.bf16.mxu0 0
        %1069 = vmatpush2.bf16.msra.mxu0 0
        %1070 = vmatprep.subr.bf16.mxu0 0
        %1071 = vmatpush2.bf16.msra.mxu0 0
        %1072 = vmatprep.subr.bf16.mxu0 0
        %1073 = vmatpush2.bf16.msra.mxu0 0
        %1074 = vmatprep.subr.bf16.mxu0 0
        %1075 = vmatpush2.bf16.msra.mxu0 0
        %1076 = vmatprep.mubr.bf16.mxu0 0
        %1077 = vmatmul.mubr.bf16.gmra.mxu0 %v1042
        %v1078 = vpop.f32.mrf.mxu0
        %v1079 = vadd.f32 0.0, %v1078
        %v1080 = vpop.f32.mrf.mxu0
        %v1081 = vpop.f32.mrf.mxu0
        %v1082 = vpop.f32.mrf.mxu0
        %1083 = vdwg.mxu0
        %v1084 = vadd.f32 %v1021, %v1079
        %1085 = vst.msk [vmem:[%s549] sm:$0xff] %vm813, %v1084
        %s1086 = sand.u32 %s361, 1
        %s1087 = scalar_lea.sflag [#allocation5], %s1086
        %s1088 = sand.u32 %s361, 1
        %s1089 = smul.addr %s1088, 8
        %s1090 = scalar_lea.vmem [#allocation4], %s1089
        %s1091 = sand.u32 %s391, 1
        %s1092 = scalar_lea.sflag [#allocation7], %s1091
        %s1093 = sand.u32 %s391, 1
        %s1094 = smul.addr %s1093, 4
        %s1095 = scalar_lea.vmem [#allocation6], %s1094
        // Predicated region
        $region81: #{tpu_custom_call.1} parent=71 // pred_check
          %p1096 = pneg %p371
        $region82: #{tpu_custom_call.1} parent=71 // pred_check_branch
          %1098 = sbr.rel (%p1096) target = $region84
        $region83: #{tpu_custom_call.1} parent=71 // pred_region
          %s1100 = ssub.s32 128, 128
          %1101 = vsyncadd %s1087, %s1100
          %s1102 = sadd.s32 %s38, %s37
          %s1103 = smul.addr %s1102, 128
          %s1104 = scalar_lea.hbm %s13, %s1103
          %s1106 = sshll.u32 %s1090, 4
          %s1107 = int_to_ptr.vmem [resolvable:$true] %s1106
          %1109 = dma.vmem_to_hbm [thread:$0]  %s1107, 128, %s1104, %s1087
        $region84: #{tpu_custom_call.1} parent=71 // pred_fallthru
          _
        // Predicated region
        $region85: #{tpu_custom_call.1} parent=71 // pred_check
          %p1110 = pneg %p401
        $region86: #{tpu_custom_call.1} parent=71 // pred_check_branch
          %1112 = sbr.rel (%p1110) target = $region88
        $region87: #{tpu_custom_call.1} parent=71 // pred_region
          %s1114 = ssub.s32 64, 64
          %1115 = vsyncadd %s1092, %s1114
          %s1116 = sadd.s32 %s38, %s39
          %s1117 = smul.addr %s37, 4
          %s1118 = sadd.s32 %s1116, %s1117
          %s1119 = smul.addr %s1118, 64
          %s1120 = scalar_lea.hbm %s14, %s1119
          %s1122 = sshll.u32 %s1095, 4
          %s1123 = int_to_ptr.vmem [resolvable:$true] %s1122
          %1125 = dma.vmem_to_hbm [thread:$0]  %s1123, 64, %s1120, %s1092
        $region88: #{tpu_custom_call.1} parent=71 // pred_fallthru
          _
      $region72: #{tpu_custom_call.1} parent=5 // pred_fallthru
        _
      %p1126 = scmp.le.s32.totalorder 2, %s27
      // Predicated region
      $region89: #{tpu_custom_call.1} parent=5 // pred_check
        %p1127 = pneg %p1126
      $region90: #{tpu_custom_call.1} parent=5 // pred_check_branch
        %1129 = sbr.rel (%p1127) target = $region92
      $region91: #{tpu_custom_call.1} parent=5 // pred_region
        %s1130 = ssub.s32 %s27, 2
        // Predicated region
        $region93: #{tpu_custom_call.1} parent=91 // pred_check
          %p1131 = pneg %p377
        $region94: #{tpu_custom_call.1} parent=91 // pred_check_branch
          %1133 = sbr.rel (%p1131) target = $region96
        $region95: #{tpu_custom_call.1} parent=91 // pred_region
          %s1134 = sand.u32 %s362, 1
          %s1135 = scalar_lea.sflag [#allocation5], %s1134
          %s1136 = sand.u32 %s362, 1
          %s1137 = smul.addr %s1136, 8
          %s1138 = scalar_lea.vmem [#allocation4], %s1137
          %1139 = dma.done %s1135, 128
        $region96: #{tpu_custom_call.1} parent=91 // pred_fallthru
          _
        // Predicated region
        $region97: #{tpu_custom_call.1} parent=91 // pred_check
          %p1140 = pneg %p407
        $region98: #{tpu_custom_call.1} parent=91 // pred_check_branch
          %1142 = sbr.rel (%p1140) target = $region100
        $region99: #{tpu_custom_call.1} parent=91 // pred_region
          %s1143 = sand.u32 %s392, 1
          %s1144 = scalar_lea.sflag [#allocation7], %s1143
          %s1145 = sand.u32 %s392, 1
          %s1146 = smul.addr %s1145, 4
          %s1147 = scalar_lea.vmem [#allocation6], %s1146
          %1148 = dma.done %s1144, 64
        $region100: #{tpu_custom_call.1} parent=91 // pred_fallthru
          _
      $region92: #{tpu_custom_call.1} parent=5 // pred_fallthru
        _
    $region6: #{tpu_custom_call.1} parent=1 // loop_footer
      %s31 = sadd.s32 1, %s27
    $region7: #{tpu_custom_call.1} parent=1 // loop_footer_branch
      %26 = sbr.rel target = $region3
    $region8: #{tpu_custom_call.1} parent=1 // loop_exit
      _
    %1149 = vsyncpa [#allocation5], 1
    %s1150 = scalar_lea.sflag [#allocation5], 1
    %1151 = vsyncpa %s1150, 1
    %1152 = vsyncpa [#allocation7], 1
    %s1153 = scalar_lea.sflag [#allocation7], 1
    %1154 = vsyncpa %s1153, 1

</llo_original>
